<compile_context>
chip_gen: v6e
topology: v6e:2x2x1
jax: 0.10.0
libtpu: 0.0.40
codegen_flags: <defaults>
</compile_context>

<pallas_src>
import functools
import math

import jax
import jax.numpy as jnp
from jax.experimental import pallas as pl
from jax.experimental.pallas import tpu as pltpu

_SUBLANE = 8


def _round_up(x: int, m: int) -> int:
    return ((x + m - 1) // m) * m


# ------------------------------------------------------------------ kernel ---

def _make_lstm_kernel(num_layers: int, hidden: int, seq_len: int, b_pad: int):
    """Builds a Pallas kernel closure for fixed (num_layers, hidden, T, B_pad)."""

    def kernel(*refs):
        # refs layout:
        #   [0]              x_tm        (T*B_pad, num_inputs)  time-major, padded
        #   [1 + 3*l + 0]    W_ih_T  l   (in_dim_l, 4H)  cols [i,f,o,g]
        #   [1 + 3*l + 1]    W_hh_T  l   (H, 4H)         cols [i,f,o,g]
        #   [1 + 3*l + 2]    bias    l   (1, 4H)  (= b_ih + b_hh)
        #   [1 + 3*L]        fc_W_T      (H, out_dim)
        #   [2 + 3*L]        fc_b        (1, out_dim)
        #   [3 + 3*L]        out         (B_pad, out_dim)
        x_ref = refs[0]
        layer_refs = refs[1:1 + 3 * num_layers]
        fc_w_ref = refs[1 + 3 * num_layers]
        fc_b_ref = refs[2 + 3 * num_layers]
        out_ref = refs[3 + 3 * num_layers]

        cur_input = x_ref[...]                              # (T*Bp, F)  f32

        h = None
        for layer in range(num_layers):
            w_ih_t = layer_refs[3 * layer + 0][...]         # (in_dim, 4H)
            w_hh_t = layer_refs[3 * layer + 1][...]         # (H, 4H)
            bias = layer_refs[3 * layer + 2][...]           # (1, 4H)

            # Hoisted input->hidden path (+ bias): one MXU op per layer.
            pre = jnp.dot(cur_input, w_ih_t,
                          preferred_element_type=jnp.float32) + bias  # (T*Bp, 4H)

            h = jnp.zeros((b_pad, hidden), jnp.float32)
            c = jnp.zeros((b_pad, hidden), jnp.float32)
            last_layer = layer == num_layers - 1
            h_seq = []

            for t in range(seq_len):
                # Only the hh matmul sits on the dependent recurrence chain.
                gates = pre[t * b_pad:(t + 1) * b_pad, :] + jnp.dot(
                    h, w_hh_t, preferred_element_type=jnp.float32)    # (Bp, 4H)
                # Gate columns reordered in the wrapper to [i, f, o, g]:
                # one sigmoid over the contiguous first 3H lanes, one tanh.
                sig = jax.nn.sigmoid(gates[:, :3 * hidden])
                g_g = jnp.tanh(gates[:, 3 * hidden:])
                i_g = sig[:, 0 * hidden:1 * hidden]
                f_g = sig[:, 1 * hidden:2 * hidden]
                o_g = sig[:, 2 * hidden:3 * hidden]
                c = f_g * c + i_g * g_g
                h = o_g * jnp.tanh(c)
                if not last_layer:
                    # Keep intermediate-layer outputs in registers; one concat
                    # forms the next layer's (T*Bp, H) slab — no VMEM scratch
                    # store/reload round-trip.
                    h_seq.append(h)

            if not last_layer:
                cur_input = jnp.concatenate(h_seq, axis=0)   # (T*Bp, H)

        # Final Linear on the last timestep's hidden state of the top layer.
        out_ref[...] = (
            jnp.dot(h, fc_w_ref[...], preferred_element_type=jnp.float32)
            + fc_b_ref[...]
        ).astype(out_ref.dtype)

    return kernel


# ----------------------------------------------------------------- wrapper ---

def _reorder_gate_cols(w, hidden):
    """Permute last-axis gate blocks from PyTorch [i, f, g, o] to [i, f, o, g]."""
    i = w[..., 0 * hidden:1 * hidden]
    f = w[..., 1 * hidden:2 * hidden]
    g = w[..., 2 * hidden:3 * hidden]
    o = w[..., 3 * hidden:4 * hidden]
    return jnp.concatenate([i, f, o, g], axis=-1)


def lstm_forecast_forward(x, params, *, hidden_size, num_layers,
                          label_width, num_outputs):
    """params: dict with per-layer 'w_ih_l{k}', 'w_hh_l{k}', 'b_ih_l{k}',
    'b_hh_l{k}' (PyTorch shapes) plus 'fc_w' (out_dim, H) and 'fc_b' (out_dim,).
    Returns (B, label_width, num_outputs)."""
    batch, seq_len, num_inputs = x.shape
    out_dim = label_width * num_outputs
    b_pad = _round_up(max(batch, _SUBLANE), _SUBLANE)

    # Time-major, batch padded to a sublane multiple: row index = t*B_pad + b.
    # The hoisted ih matmul is a single (T*B_pad, F) x (F, 4H) op and every
    # per-timestep slice starts on an 8-sublane boundary.
    x_tm = jnp.transpose(x, (1, 0, 2)).astype(jnp.float32)          # (T, B, F)
    x_tm = jnp.pad(x_tm, ((0, 0), (0, b_pad - batch), (0, 0)))      # (T, Bp, F)
    x_tm = x_tm.reshape(seq_len * b_pad, num_inputs)                # (T*Bp, F)

    vmem = pl.BlockSpec(memory_space=pltpu.MemorySpace.VMEM)
    kernel_args = [x_tm]
    in_specs = [vmem]
    for layer in range(num_layers):
        w_ih_t = _reorder_gate_cols(
            params[f"w_ih_l{layer}"].T.astype(jnp.float32), hidden_size)
        w_hh_t = _reorder_gate_cols(
            params[f"w_hh_l{layer}"].T.astype(jnp.float32), hidden_size)
        b = _reorder_gate_cols(
            (params[f"b_ih_l{layer}"] + params[f"b_hh_l{layer}"])
            .reshape(1, -1).astype(jnp.float32),
            hidden_size)
        kernel_args += [w_ih_t, w_hh_t, b]
        in_specs += [vmem] * 3
    kernel_args += [params["fc_w"].T.astype(jnp.float32),
                    params["fc_b"].reshape(1, -1).astype(jnp.float32)]
    in_specs += [vmem] * 2

    kernel = _make_lstm_kernel(num_layers, hidden_size, seq_len, b_pad)
    out_pad = pl.pallas_call(
        kernel,
        out_shape=jax.ShapeDtypeStruct((b_pad, out_dim), jnp.float32),
        in_specs=in_specs,
        out_specs=pl.BlockSpec(memory_space=pltpu.MemorySpace.VMEM),
    )(*kernel_args)

    # Drop the pad rows (they were computed from zero inputs / zero init and
    # never influence the real batch rows).
    return out_pad[:batch].reshape(batch, label_width, num_outputs)


# --------------------------------------------------------- pure-JAX reference

def lstm_forecast_reference(x, params, *, hidden_size, num_layers,
                            label_width, num_outputs):
    batch, seq_len, _ = x.shape
    layer_in = x.astype(jnp.float32)
    for layer in range(num_layers):
        w_ih = params[f"w_ih_l{layer}"]
        w_hh = params[f"w_hh_l{layer}"]
        b = params[f"b_ih_l{layer}"] + params[f"b_hh_l{layer}"]
        h = jnp.zeros((batch, hidden_size), jnp.float32)
        c = jnp.zeros((batch, hidden_size), jnp.float32)
        outs = []
        for t in range(seq_len):
            gates = layer_in[:, t, :] @ w_ih.T + h @ w_hh.T + b
            i_g = jax.nn.sigmoid(gates[:, 0 * hidden_size:1 * hidden_size])
            f_g = jax.nn.sigmoid(gates[:, 1 * hidden_size:2 * hidden_size])
            g_g = jnp.tanh(gates[:, 2 * hidden_size:3 * hidden_size])
            o_g = jax.nn.sigmoid(gates[:, 3 * hidden_size:4 * hidden_size])
            c = f_g * c + i_g * g_g
            h = o_g * jnp.tanh(c)
            outs.append(h)
        layer_in = jnp.stack(outs, axis=1)
    out = layer_in[:, -1, :] @ params["fc_w"].T + params["fc_b"]
    return out.reshape(batch, label_width, num_outputs)


# -------------------------------------------------------------------- main ---

if __name__ == "__main__":
    # Model config (matches LSTMForecastModel.__init__ arguments)
    input_width = 8        # sequence length T
    label_width = 4
    hidden_size = 32
    num_layers = 2
    num_inputs = 4
    num_outputs = 3
    batch = 2

    key = jax.random.PRNGKey(0)

    # Deterministic PyTorch-style init: U(-1/sqrt(H), 1/sqrt(H)).
    k = 1.0 / math.sqrt(hidden_size)
    params = {}
    for layer in range(num_layers):
        in_dim = num_inputs if layer == 0 else hidden_size
        key, k1, k2, k3, k4 = jax.random.split(key, 5)
        params[f"w_ih_l{layer}"] = jax.random.uniform(
            k1, (4 * hidden_size, in_dim), jnp.float32, -k, k)
        params[f"w_hh_l{layer}"] = jax.random.uniform(
            k2, (4 * hidden_size, hidden_size), jnp.float32, -k, k)
        params[f"b_ih_l{layer}"] = jax.random.uniform(
            k3, (4 * hidden_size,), jnp.float32, -k, k)
        params[f"b_hh_l{layer}"] = jax.random.uniform(
            k4, (4 * hidden_size,), jnp.float32, -k, k)
    key, kfw, kfb, kx = jax.random.split(key, 4)
    out_dim = num_outputs * label_width
    kfc = 1.0 / math.sqrt(hidden_size)
    params["fc_w"] = jax.random.uniform(
        kfw, (out_dim, hidden_size), jnp.float32, -kfc, kfc)
    params["fc_b"] = jax.random.uniform(
        kfb, (out_dim,), jnp.float32, -kfc, kfc)

    x = jax.random.normal(kx, (batch, input_width, num_inputs), jnp.float32)

    run = functools.partial(
        lstm_forecast_forward,
        hidden_size=hidden_size, num_layers=num_layers,
        label_width=label_width, num_outputs=num_outputs)

    out = jax.block_until_ready(run(x, params))
    assert out.shape == (batch, label_width, num_outputs)

    ref = lstm_forecast_reference(
        x, params, hidden_size=hidden_size, num_layers=num_layers,
        label_width=label_width, num_outputs=num_outputs)
    assert jnp.allclose(out, ref, atol=1e-5, rtol=1e-5), (
        "Pallas output does not match pure-JAX reference")

    print("KERNEL_OK")
</pallas_src>

<mosaic_0001>
module attributes {stable_mosaic.version = 11 : i64} {
  func.func @kernel(%arg0: memref<64x4xf32, #tpu.memory_space<vmem>>, %arg1: memref<4x128xf32, #tpu.memory_space<vmem>>, %arg2: memref<32x128xf32, #tpu.memory_space<vmem>>, %arg3: memref<1x128xf32, #tpu.memory_space<vmem>>, %arg4: memref<32x128xf32, #tpu.memory_space<vmem>>, %arg5: memref<32x128xf32, #tpu.memory_space<vmem>>, %arg6: memref<1x128xf32, #tpu.memory_space<vmem>>, %arg7: memref<32x12xf32, #tpu.memory_space<vmem>>, %arg8: memref<1x12xf32, #tpu.memory_space<vmem>>, %arg9: memref<8x12xf32, #tpu.memory_space<vmem>>) attributes {dimension_semantics = [], scalar_prefetch = 0 : i64, scratch_operands = 0 : i64, tpu.core_type = #tpu.core_type<tc>} {
    %c0 = arith.constant 0 : index
    %c0_0 = arith.constant 0 : index
    %0 = vector.load %arg0[%c0, %c0_0] : memref<64x4xf32, #tpu.memory_space<vmem>>, vector<64x4xf32>
    %c0_1 = arith.constant 0 : index
    %c0_2 = arith.constant 0 : index
    %1 = vector.load %arg1[%c0_1, %c0_2] : memref<4x128xf32, #tpu.memory_space<vmem>>, vector<4x128xf32>
    %c0_3 = arith.constant 0 : index
    %c0_4 = arith.constant 0 : index
    %2 = vector.load %arg2[%c0_3, %c0_4] : memref<32x128xf32, #tpu.memory_space<vmem>>, vector<32x128xf32>
    %c0_5 = arith.constant 0 : index
    %c0_6 = arith.constant 0 : index
    %3 = vector.load %arg3[%c0_5, %c0_6] : memref<1x128xf32, #tpu.memory_space<vmem>>, vector<1x128xf32>
    %cst = arith.constant dense<0.000000e+00> : vector<64x128xf32>
    %4 = tpu.matmul %0, %1, %cst {dimension_numbers = #tpu.dot_dimension_numbers<[1], [0], [0], [1], [0, 0, 1, 1], [], []>} : vector<64x4xf32>, vector<4x128xf32>, vector<64x128xf32> -> vector<64x128xf32>
    %5 = vector.broadcast %3 : vector<1x128xf32> to vector<64x128xf32>
    %6 = arith.addf %4, %5 : vector<64x128xf32>
    %cst_7 = arith.constant 0.000000e+00 : f32
    %7 = vector.broadcast %cst_7 : f32 to vector<8x32xf32>
    %cst_8 = arith.constant 0.000000e+00 : f32
    %8 = vector.broadcast %cst_8 : f32 to vector<8x32xf32>
    %9 = vector.extract_strided_slice %6 {offsets = [0, 0], sizes = [8, 128], strides = [1, 1]} : vector<64x128xf32> to vector<8x128xf32>
    %cst_9 = arith.constant dense<0.000000e+00> : vector<8x128xf32>
    %10 = tpu.matmul %7, %2, %cst_9 {dimension_numbers = #tpu.dot_dimension_numbers<[1], [0], [0], [1], [0, 0, 1, 1], [], []>} : vector<8x32xf32>, vector<32x128xf32>, vector<8x128xf32> -> vector<8x128xf32>
    %11 = arith.addf %9, %10 : vector<8x128xf32>
    %12 = vector.extract_strided_slice %11 {offsets = [0, 0], sizes = [8, 96], strides = [1, 1]} : vector<8x128xf32> to vector<8x96xf32>
    %13 = arith.negf %12 : vector<8x96xf32>
    %14 = math.exp %13 : vector<8x96xf32>
    %cst_10 = arith.constant 1.000000e+00 : f32
    %15 = vector.broadcast %cst_10 : f32 to vector<8x96xf32>
    %16 = arith.addf %15, %14 : vector<8x96xf32>
    %17 = arith.divf %15, %16 : vector<8x96xf32>
    %18 = vector.extract_strided_slice %11 {offsets = [0, 96], sizes = [8, 32], strides = [1, 1]} : vector<8x128xf32> to vector<8x32xf32>
    %19 = math.tanh %18 : vector<8x32xf32>
    %20 = vector.extract_strided_slice %17 {offsets = [0, 0], sizes = [8, 32], strides = [1, 1]} : vector<8x96xf32> to vector<8x32xf32>
    %21 = vector.extract_strided_slice %17 {offsets = [0, 32], sizes = [8, 32], strides = [1, 1]} : vector<8x96xf32> to vector<8x32xf32>
    %22 = vector.extract_strided_slice %17 {offsets = [0, 64], sizes = [8, 32], strides = [1, 1]} : vector<8x96xf32> to vector<8x32xf32>
    %23 = arith.mulf %21, %8 : vector<8x32xf32>
    %24 = arith.mulf %20, %19 : vector<8x32xf32>
    %25 = arith.addf %23, %24 : vector<8x32xf32>
    %26 = math.tanh %25 : vector<8x32xf32>
    %27 = arith.mulf %22, %26 : vector<8x32xf32>
    %28 = vector.extract_strided_slice %6 {offsets = [8, 0], sizes = [8, 128], strides = [1, 1]} : vector<64x128xf32> to vector<8x128xf32>
    %cst_11 = arith.constant dense<0.000000e+00> : vector<8x128xf32>
    %29 = tpu.matmul %27, %2, %cst_11 {dimension_numbers = #tpu.dot_dimension_numbers<[1], [0], [0], [1], [0, 0, 1, 1], [], []>} : vector<8x32xf32>, vector<32x128xf32>, vector<8x128xf32> -> vector<8x128xf32>
    %30 = arith.addf %28, %29 : vector<8x128xf32>
    %31 = vector.extract_strided_slice %30 {offsets = [0, 0], sizes = [8, 96], strides = [1, 1]} : vector<8x128xf32> to vector<8x96xf32>
    %32 = arith.negf %31 : vector<8x96xf32>
    %33 = math.exp %32 : vector<8x96xf32>
    %cst_12 = arith.constant 1.000000e+00 : f32
    %34 = vector.broadcast %cst_12 : f32 to vector<8x96xf32>
    %35 = arith.addf %34, %33 : vector<8x96xf32>
    %36 = arith.divf %34, %35 : vector<8x96xf32>
    %37 = vector.extract_strided_slice %30 {offsets = [0, 96], sizes = [8, 32], strides = [1, 1]} : vector<8x128xf32> to vector<8x32xf32>
    %38 = math.tanh %37 : vector<8x32xf32>
    %39 = vector.extract_strided_slice %36 {offsets = [0, 0], sizes = [8, 32], strides = [1, 1]} : vector<8x96xf32> to vector<8x32xf32>
    %40 = vector.extract_strided_slice %36 {offsets = [0, 32], sizes = [8, 32], strides = [1, 1]} : vector<8x96xf32> to vector<8x32xf32>
    %41 = vector.extract_strided_slice %36 {offsets = [0, 64], sizes = [8, 32], strides = [1, 1]} : vector<8x96xf32> to vector<8x32xf32>
    %42 = arith.mulf %40, %25 : vector<8x32xf32>
    %43 = arith.mulf %39, %38 : vector<8x32xf32>
    %44 = arith.addf %42, %43 : vector<8x32xf32>
    %45 = math.tanh %44 : vector<8x32xf32>
    %46 = arith.mulf %41, %45 : vector<8x32xf32>
    %47 = vector.extract_strided_slice %6 {offsets = [16, 0], sizes = [8, 128], strides = [1, 1]} : vector<64x128xf32> to vector<8x128xf32>
    %cst_13 = arith.constant dense<0.000000e+00> : vector<8x128xf32>
    %48 = tpu.matmul %46, %2, %cst_13 {dimension_numbers = #tpu.dot_dimension_numbers<[1], [0], [0], [1], [0, 0, 1, 1], [], []>} : vector<8x32xf32>, vector<32x128xf32>, vector<8x128xf32> -> vector<8x128xf32>
    %49 = arith.addf %47, %48 : vector<8x128xf32>
    %50 = vector.extract_strided_slice %49 {offsets = [0, 0], sizes = [8, 96], strides = [1, 1]} : vector<8x128xf32> to vector<8x96xf32>
    %51 = arith.negf %50 : vector<8x96xf32>
    %52 = math.exp %51 : vector<8x96xf32>
    %cst_14 = arith.constant 1.000000e+00 : f32
    %53 = vector.broadcast %cst_14 : f32 to vector<8x96xf32>
    %54 = arith.addf %53, %52 : vector<8x96xf32>
    %55 = arith.divf %53, %54 : vector<8x96xf32>
    %56 = vector.extract_strided_slice %49 {offsets = [0, 96], sizes = [8, 32], strides = [1, 1]} : vector<8x128xf32> to vector<8x32xf32>
    %57 = math.tanh %56 : vector<8x32xf32>
    %58 = vector.extract_strided_slice %55 {offsets = [0, 0], sizes = [8, 32], strides = [1, 1]} : vector<8x96xf32> to vector<8x32xf32>
    %59 = vector.extract_strided_slice %55 {offsets = [0, 32], sizes = [8, 32], strides = [1, 1]} : vector<8x96xf32> to vector<8x32xf32>
    %60 = vector.extract_strided_slice %55 {offsets = [0, 64], sizes = [8, 32], strides = [1, 1]} : vector<8x96xf32> to vector<8x32xf32>
    %61 = arith.mulf %59, %44 : vector<8x32xf32>
    %62 = arith.mulf %58, %57 : vector<8x32xf32>
    %63 = arith.addf %61, %62 : vector<8x32xf32>
    %64 = math.tanh %63 : vector<8x32xf32>
    %65 = arith.mulf %60, %64 : vector<8x32xf32>
    %66 = vector.extract_strided_slice %6 {offsets = [24, 0], sizes = [8, 128], strides = [1, 1]} : vector<64x128xf32> to vector<8x128xf32>
    %cst_15 = arith.constant dense<0.000000e+00> : vector<8x128xf32>
    %67 = tpu.matmul %65, %2, %cst_15 {dimension_numbers = #tpu.dot_dimension_numbers<[1], [0], [0], [1], [0, 0, 1, 1], [], []>} : vector<8x32xf32>, vector<32x128xf32>, vector<8x128xf32> -> vector<8x128xf32>
    %68 = arith.addf %66, %67 : vector<8x128xf32>
    %69 = vector.extract_strided_slice %68 {offsets = [0, 0], sizes = [8, 96], strides = [1, 1]} : vector<8x128xf32> to vector<8x96xf32>
    %70 = arith.negf %69 : vector<8x96xf32>
    %71 = math.exp %70 : vector<8x96xf32>
    %cst_16 = arith.constant 1.000000e+00 : f32
    %72 = vector.broadcast %cst_16 : f32 to vector<8x96xf32>
    %73 = arith.addf %72, %71 : vector<8x96xf32>
    %74 = arith.divf %72, %73 : vector<8x96xf32>
    %75 = vector.extract_strided_slice %68 {offsets = [0, 96], sizes = [8, 32], strides = [1, 1]} : vector<8x128xf32> to vector<8x32xf32>
    %76 = math.tanh %75 : vector<8x32xf32>
    %77 = vector.extract_strided_slice %74 {offsets = [0, 0], sizes = [8, 32], strides = [1, 1]} : vector<8x96xf32> to vector<8x32xf32>
    %78 = vector.extract_strided_slice %74 {offsets = [0, 32], sizes = [8, 32], strides = [1, 1]} : vector<8x96xf32> to vector<8x32xf32>
    %79 = vector.extract_strided_slice %74 {offsets = [0, 64], sizes = [8, 32], strides = [1, 1]} : vector<8x96xf32> to vector<8x32xf32>
    %80 = arith.mulf %78, %63 : vector<8x32xf32>
    %81 = arith.mulf %77, %76 : vector<8x32xf32>
    %82 = arith.addf %80, %81 : vector<8x32xf32>
    %83 = math.tanh %82 : vector<8x32xf32>
    %84 = arith.mulf %79, %83 : vector<8x32xf32>
    %85 = vector.extract_strided_slice %6 {offsets = [32, 0], sizes = [8, 128], strides = [1, 1]} : vector<64x128xf32> to vector<8x128xf32>
    %cst_17 = arith.constant dense<0.000000e+00> : vector<8x128xf32>
    %86 = tpu.matmul %84, %2, %cst_17 {dimension_numbers = #tpu.dot_dimension_numbers<[1], [0], [0], [1], [0, 0, 1, 1], [], []>} : vector<8x32xf32>, vector<32x128xf32>, vector<8x128xf32> -> vector<8x128xf32>
    %87 = arith.addf %85, %86 : vector<8x128xf32>
    %88 = vector.extract_strided_slice %87 {offsets = [0, 0], sizes = [8, 96], strides = [1, 1]} : vector<8x128xf32> to vector<8x96xf32>
    %89 = arith.negf %88 : vector<8x96xf32>
    %90 = math.exp %89 : vector<8x96xf32>
    %cst_18 = arith.constant 1.000000e+00 : f32
    %91 = vector.broadcast %cst_18 : f32 to vector<8x96xf32>
    %92 = arith.addf %91, %90 : vector<8x96xf32>
    %93 = arith.divf %91, %92 : vector<8x96xf32>
    %94 = vector.extract_strided_slice %87 {offsets = [0, 96], sizes = [8, 32], strides = [1, 1]} : vector<8x128xf32> to vector<8x32xf32>
    %95 = math.tanh %94 : vector<8x32xf32>
    %96 = vector.extract_strided_slice %93 {offsets = [0, 0], sizes = [8, 32], strides = [1, 1]} : vector<8x96xf32> to vector<8x32xf32>
    %97 = vector.extract_strided_slice %93 {offsets = [0, 32], sizes = [8, 32], strides = [1, 1]} : vector<8x96xf32> to vector<8x32xf32>
    %98 = vector.extract_strided_slice %93 {offsets = [0, 64], sizes = [8, 32], strides = [1, 1]} : vector<8x96xf32> to vector<8x32xf32>
    %99 = arith.mulf %97, %82 : vector<8x32xf32>
    %100 = arith.mulf %96, %95 : vector<8x32xf32>
    %101 = arith.addf %99, %100 : vector<8x32xf32>
    %102 = math.tanh %101 : vector<8x32xf32>
    %103 = arith.mulf %98, %102 : vector<8x32xf32>
    %104 = vector.extract_strided_slice %6 {offsets = [40, 0], sizes = [8, 128], strides = [1, 1]} : vector<64x128xf32> to vector<8x128xf32>
    %cst_19 = arith.constant dense<0.000000e+00> : vector<8x128xf32>
    %105 = tpu.matmul %103, %2, %cst_19 {dimension_numbers = #tpu.dot_dimension_numbers<[1], [0], [0], [1], [0, 0, 1, 1], [], []>} : vector<8x32xf32>, vector<32x128xf32>, vector<8x128xf32> -> vector<8x128xf32>
    %106 = arith.addf %104, %105 : vector<8x128xf32>
    %107 = vector.extract_strided_slice %106 {offsets = [0, 0], sizes = [8, 96], strides = [1, 1]} : vector<8x128xf32> to vector<8x96xf32>
    %108 = arith.negf %107 : vector<8x96xf32>
    %109 = math.exp %108 : vector<8x96xf32>
    %cst_20 = arith.constant 1.000000e+00 : f32
    %110 = vector.broadcast %cst_20 : f32 to vector<8x96xf32>
    %111 = arith.addf %110, %109 : vector<8x96xf32>
    %112 = arith.divf %110, %111 : vector<8x96xf32>
    %113 = vector.extract_strided_slice %106 {offsets = [0, 96], sizes = [8, 32], strides = [1, 1]} : vector<8x128xf32> to vector<8x32xf32>
    %114 = math.tanh %113 : vector<8x32xf32>
    %115 = vector.extract_strided_slice %112 {offsets = [0, 0], sizes = [8, 32], strides = [1, 1]} : vector<8x96xf32> to vector<8x32xf32>
    %116 = vector.extract_strided_slice %112 {offsets = [0, 32], sizes = [8, 32], strides = [1, 1]} : vector<8x96xf32> to vector<8x32xf32>
    %117 = vector.extract_strided_slice %112 {offsets = [0, 64], sizes = [8, 32], strides = [1, 1]} : vector<8x96xf32> to vector<8x32xf32>
    %118 = arith.mulf %116, %101 : vector<8x32xf32>
    %119 = arith.mulf %115, %114 : vector<8x32xf32>
    %120 = arith.addf %118, %119 : vector<8x32xf32>
    %121 = math.tanh %120 : vector<8x32xf32>
    %122 = arith.mulf %117, %121 : vector<8x32xf32>
    %123 = vector.extract_strided_slice %6 {offsets = [48, 0], sizes = [8, 128], strides = [1, 1]} : vector<64x128xf32> to vector<8x128xf32>
    %cst_21 = arith.constant dense<0.000000e+00> : vector<8x128xf32>
    %124 = tpu.matmul %122, %2, %cst_21 {dimension_numbers = #tpu.dot_dimension_numbers<[1], [0], [0], [1], [0, 0, 1, 1], [], []>} : vector<8x32xf32>, vector<32x128xf32>, vector<8x128xf32> -> vector<8x128xf32>
    %125 = arith.addf %123, %124 : vector<8x128xf32>
    %126 = vector.extract_strided_slice %125 {offsets = [0, 0], sizes = [8, 96], strides = [1, 1]} : vector<8x128xf32> to vector<8x96xf32>
    %127 = arith.negf %126 : vector<8x96xf32>
    %128 = math.exp %127 : vector<8x96xf32>
    %cst_22 = arith.constant 1.000000e+00 : f32
    %129 = vector.broadcast %cst_22 : f32 to vector<8x96xf32>
    %130 = arith.addf %129, %128 : vector<8x96xf32>
    %131 = arith.divf %129, %130 : vector<8x96xf32>
    %132 = vector.extract_strided_slice %125 {offsets = [0, 96], sizes = [8, 32], strides = [1, 1]} : vector<8x128xf32> to vector<8x32xf32>
    %133 = math.tanh %132 : vector<8x32xf32>
    %134 = vector.extract_strided_slice %131 {offsets = [0, 0], sizes = [8, 32], strides = [1, 1]} : vector<8x96xf32> to vector<8x32xf32>
    %135 = vector.extract_strided_slice %131 {offsets = [0, 32], sizes = [8, 32], strides = [1, 1]} : vector<8x96xf32> to vector<8x32xf32>
    %136 = vector.extract_strided_slice %131 {offsets = [0, 64], sizes = [8, 32], strides = [1, 1]} : vector<8x96xf32> to vector<8x32xf32>
    %137 = arith.mulf %135, %120 : vector<8x32xf32>
    %138 = arith.mulf %134, %133 : vector<8x32xf32>
    %139 = arith.addf %137, %138 : vector<8x32xf32>
    %140 = math.tanh %139 : vector<8x32xf32>
    %141 = arith.mulf %136, %140 : vector<8x32xf32>
    %142 = vector.extract_strided_slice %6 {offsets = [56, 0], sizes = [8, 128], strides = [1, 1]} : vector<64x128xf32> to vector<8x128xf32>
    %cst_23 = arith.constant dense<0.000000e+00> : vector<8x128xf32>
    %143 = tpu.matmul %141, %2, %cst_23 {dimension_numbers = #tpu.dot_dimension_numbers<[1], [0], [0], [1], [0, 0, 1, 1], [], []>} : vector<8x32xf32>, vector<32x128xf32>, vector<8x128xf32> -> vector<8x128xf32>
    %144 = arith.addf %142, %143 : vector<8x128xf32>
    %145 = vector.extract_strided_slice %144 {offsets = [0, 0], sizes = [8, 96], strides = [1, 1]} : vector<8x128xf32> to vector<8x96xf32>
    %146 = arith.negf %145 : vector<8x96xf32>
    %147 = math.exp %146 : vector<8x96xf32>
    %cst_24 = arith.constant 1.000000e+00 : f32
    %148 = vector.broadcast %cst_24 : f32 to vector<8x96xf32>
    %149 = arith.addf %148, %147 : vector<8x96xf32>
    %150 = arith.divf %148, %149 : vector<8x96xf32>
    %151 = vector.extract_strided_slice %144 {offsets = [0, 96], sizes = [8, 32], strides = [1, 1]} : vector<8x128xf32> to vector<8x32xf32>
    %152 = math.tanh %151 : vector<8x32xf32>
    %153 = vector.extract_strided_slice %150 {offsets = [0, 0], sizes = [8, 32], strides = [1, 1]} : vector<8x96xf32> to vector<8x32xf32>
    %154 = vector.extract_strided_slice %150 {offsets = [0, 32], sizes = [8, 32], strides = [1, 1]} : vector<8x96xf32> to vector<8x32xf32>
    %155 = vector.extract_strided_slice %150 {offsets = [0, 64], sizes = [8, 32], strides = [1, 1]} : vector<8x96xf32> to vector<8x32xf32>
    %156 = arith.mulf %154, %139 : vector<8x32xf32>
    %157 = arith.mulf %153, %152 : vector<8x32xf32>
    %158 = arith.addf %156, %157 : vector<8x32xf32>
    %159 = math.tanh %158 : vector<8x32xf32>
    %160 = arith.mulf %155, %159 : vector<8x32xf32>
    %161 = tpu.concatenate %27, %46, %65, %84, %103, %122, %141, %160 in 0 : vector<8x32xf32>, vector<8x32xf32>, vector<8x32xf32>, vector<8x32xf32>, vector<8x32xf32>, vector<8x32xf32>, vector<8x32xf32>, vector<8x32xf32> -> vector<64x32xf32>
    %c0_25 = arith.constant 0 : index
    %c0_26 = arith.constant 0 : index
    %162 = vector.load %arg4[%c0_25, %c0_26] : memref<32x128xf32, #tpu.memory_space<vmem>>, vector<32x128xf32>
    %c0_27 = arith.constant 0 : index
    %c0_28 = arith.constant 0 : index
    %163 = vector.load %arg5[%c0_27, %c0_28] : memref<32x128xf32, #tpu.memory_space<vmem>>, vector<32x128xf32>
    %c0_29 = arith.constant 0 : index
    %c0_30 = arith.constant 0 : index
    %164 = vector.load %arg6[%c0_29, %c0_30] : memref<1x128xf32, #tpu.memory_space<vmem>>, vector<1x128xf32>
    %cst_31 = arith.constant dense<0.000000e+00> : vector<64x128xf32>
    %165 = tpu.matmul %161, %162, %cst_31 {dimension_numbers = #tpu.dot_dimension_numbers<[1], [0], [0], [1], [0, 0, 1, 1], [], []>} : vector<64x32xf32>, vector<32x128xf32>, vector<64x128xf32> -> vector<64x128xf32>
    %166 = vector.broadcast %164 : vector<1x128xf32> to vector<64x128xf32>
    %167 = arith.addf %165, %166 : vector<64x128xf32>
    %cst_32 = arith.constant 0.000000e+00 : f32
    %168 = vector.broadcast %cst_32 : f32 to vector<8x32xf32>
    %cst_33 = arith.constant 0.000000e+00 : f32
    %169 = vector.broadcast %cst_33 : f32 to vector<8x32xf32>
    %170 = vector.extract_strided_slice %167 {offsets = [0, 0], sizes = [8, 128], strides = [1, 1]} : vector<64x128xf32> to vector<8x128xf32>
    %cst_34 = arith.constant dense<0.000000e+00> : vector<8x128xf32>
    %171 = tpu.matmul %168, %163, %cst_34 {dimension_numbers = #tpu.dot_dimension_numbers<[1], [0], [0], [1], [0, 0, 1, 1], [], []>} : vector<8x32xf32>, vector<32x128xf32>, vector<8x128xf32> -> vector<8x128xf32>
    %172 = arith.addf %170, %171 : vector<8x128xf32>
    %173 = vector.extract_strided_slice %172 {offsets = [0, 0], sizes = [8, 96], strides = [1, 1]} : vector<8x128xf32> to vector<8x96xf32>
    %174 = arith.negf %173 : vector<8x96xf32>
    %175 = math.exp %174 : vector<8x96xf32>
    %cst_35 = arith.constant 1.000000e+00 : f32
    %176 = vector.broadcast %cst_35 : f32 to vector<8x96xf32>
    %177 = arith.addf %176, %175 : vector<8x96xf32>
    %178 = arith.divf %176, %177 : vector<8x96xf32>
    %179 = vector.extract_strided_slice %172 {offsets = [0, 96], sizes = [8, 32], strides = [1, 1]} : vector<8x128xf32> to vector<8x32xf32>
    %180 = math.tanh %179 : vector<8x32xf32>
    %181 = vector.extract_strided_slice %178 {offsets = [0, 0], sizes = [8, 32], strides = [1, 1]} : vector<8x96xf32> to vector<8x32xf32>
    %182 = vector.extract_strided_slice %178 {offsets = [0, 32], sizes = [8, 32], strides = [1, 1]} : vector<8x96xf32> to vector<8x32xf32>
    %183 = vector.extract_strided_slice %178 {offsets = [0, 64], sizes = [8, 32], strides = [1, 1]} : vector<8x96xf32> to vector<8x32xf32>
    %184 = arith.mulf %182, %169 : vector<8x32xf32>
    %185 = arith.mulf %181, %180 : vector<8x32xf32>
    %186 = arith.addf %184, %185 : vector<8x32xf32>
    %187 = math.tanh %186 : vector<8x32xf32>
    %188 = arith.mulf %183, %187 : vector<8x32xf32>
    %189 = vector.extract_strided_slice %167 {offsets = [8, 0], sizes = [8, 128], strides = [1, 1]} : vector<64x128xf32> to vector<8x128xf32>
    %cst_36 = arith.constant dense<0.000000e+00> : vector<8x128xf32>
    %190 = tpu.matmul %188, %163, %cst_36 {dimension_numbers = #tpu.dot_dimension_numbers<[1], [0], [0], [1], [0, 0, 1, 1], [], []>} : vector<8x32xf32>, vector<32x128xf32>, vector<8x128xf32> -> vector<8x128xf32>
    %191 = arith.addf %189, %190 : vector<8x128xf32>
    %192 = vector.extract_strided_slice %191 {offsets = [0, 0], sizes = [8, 96], strides = [1, 1]} : vector<8x128xf32> to vector<8x96xf32>
    %193 = arith.negf %192 : vector<8x96xf32>
    %194 = math.exp %193 : vector<8x96xf32>
    %cst_37 = arith.constant 1.000000e+00 : f32
    %195 = vector.broadcast %cst_37 : f32 to vector<8x96xf32>
    %196 = arith.addf %195, %194 : vector<8x96xf32>
    %197 = arith.divf %195, %196 : vector<8x96xf32>
    %198 = vector.extract_strided_slice %191 {offsets = [0, 96], sizes = [8, 32], strides = [1, 1]} : vector<8x128xf32> to vector<8x32xf32>
    %199 = math.tanh %198 : vector<8x32xf32>
    %200 = vector.extract_strided_slice %197 {offsets = [0, 0], sizes = [8, 32], strides = [1, 1]} : vector<8x96xf32> to vector<8x32xf32>
    %201 = vector.extract_strided_slice %197 {offsets = [0, 32], sizes = [8, 32], strides = [1, 1]} : vector<8x96xf32> to vector<8x32xf32>
    %202 = vector.extract_strided_slice %197 {offsets = [0, 64], sizes = [8, 32], strides = [1, 1]} : vector<8x96xf32> to vector<8x32xf32>
    %203 = arith.mulf %201, %186 : vector<8x32xf32>
    %204 = arith.mulf %200, %199 : vector<8x32xf32>
    %205 = arith.addf %203, %204 : vector<8x32xf32>
    %206 = math.tanh %205 : vector<8x32xf32>
    %207 = arith.mulf %202, %206 : vector<8x32xf32>
    %208 = vector.extract_strided_slice %167 {offsets = [16, 0], sizes = [8, 128], strides = [1, 1]} : vector<64x128xf32> to vector<8x128xf32>
    %cst_38 = arith.constant dense<0.000000e+00> : vector<8x128xf32>
    %209 = tpu.matmul %207, %163, %cst_38 {dimension_numbers = #tpu.dot_dimension_numbers<[1], [0], [0], [1], [0, 0, 1, 1], [], []>} : vector<8x32xf32>, vector<32x128xf32>, vector<8x128xf32> -> vector<8x128xf32>
    %210 = arith.addf %208, %209 : vector<8x128xf32>
    %211 = vector.extract_strided_slice %210 {offsets = [0, 0], sizes = [8, 96], strides = [1, 1]} : vector<8x128xf32> to vector<8x96xf32>
    %212 = arith.negf %211 : vector<8x96xf32>
    %213 = math.exp %212 : vector<8x96xf32>
    %cst_39 = arith.constant 1.000000e+00 : f32
    %214 = vector.broadcast %cst_39 : f32 to vector<8x96xf32>
    %215 = arith.addf %214, %213 : vector<8x96xf32>
    %216 = arith.divf %214, %215 : vector<8x96xf32>
    %217 = vector.extract_strided_slice %210 {offsets = [0, 96], sizes = [8, 32], strides = [1, 1]} : vector<8x128xf32> to vector<8x32xf32>
    %218 = math.tanh %217 : vector<8x32xf32>
    %219 = vector.extract_strided_slice %216 {offsets = [0, 0], sizes = [8, 32], strides = [1, 1]} : vector<8x96xf32> to vector<8x32xf32>
    %220 = vector.extract_strided_slice %216 {offsets = [0, 32], sizes = [8, 32], strides = [1, 1]} : vector<8x96xf32> to vector<8x32xf32>
    %221 = vector.extract_strided_slice %216 {offsets = [0, 64], sizes = [8, 32], strides = [1, 1]} : vector<8x96xf32> to vector<8x32xf32>
    %222 = arith.mulf %220, %205 : vector<8x32xf32>
    %223 = arith.mulf %219, %218 : vector<8x32xf32>
    %224 = arith.addf %222, %223 : vector<8x32xf32>
    %225 = math.tanh %224 : vector<8x32xf32>
    %226 = arith.mulf %221, %225 : vector<8x32xf32>
    %227 = vector.extract_strided_slice %167 {offsets = [24, 0], sizes = [8, 128], strides = [1, 1]} : vector<64x128xf32> to vector<8x128xf32>
    %cst_40 = arith.constant dense<0.000000e+00> : vector<8x128xf32>
    %228 = tpu.matmul %226, %163, %cst_40 {dimension_numbers = #tpu.dot_dimension_numbers<[1], [0], [0], [1], [0, 0, 1, 1], [], []>} : vector<8x32xf32>, vector<32x128xf32>, vector<8x128xf32> -> vector<8x128xf32>
    %229 = arith.addf %227, %228 : vector<8x128xf32>
    %230 = vector.extract_strided_slice %229 {offsets = [0, 0], sizes = [8, 96], strides = [1, 1]} : vector<8x128xf32> to vector<8x96xf32>
    %231 = arith.negf %230 : vector<8x96xf32>
    %232 = math.exp %231 : vector<8x96xf32>
    %cst_41 = arith.constant 1.000000e+00 : f32
    %233 = vector.broadcast %cst_41 : f32 to vector<8x96xf32>
    %234 = arith.addf %233, %232 : vector<8x96xf32>
    %235 = arith.divf %233, %234 : vector<8x96xf32>
    %236 = vector.extract_strided_slice %229 {offsets = [0, 96], sizes = [8, 32], strides = [1, 1]} : vector<8x128xf32> to vector<8x32xf32>
    %237 = math.tanh %236 : vector<8x32xf32>
    %238 = vector.extract_strided_slice %235 {offsets = [0, 0], sizes = [8, 32], strides = [1, 1]} : vector<8x96xf32> to vector<8x32xf32>
    %239 = vector.extract_strided_slice %235 {offsets = [0, 32], sizes = [8, 32], strides = [1, 1]} : vector<8x96xf32> to vector<8x32xf32>
    %240 = vector.extract_strided_slice %235 {offsets = [0, 64], sizes = [8, 32], strides = [1, 1]} : vector<8x96xf32> to vector<8x32xf32>
    %241 = arith.mulf %239, %224 : vector<8x32xf32>
    %242 = arith.mulf %238, %237 : vector<8x32xf32>
    %243 = arith.addf %241, %242 : vector<8x32xf32>
    %244 = math.tanh %243 : vector<8x32xf32>
    %245 = arith.mulf %240, %244 : vector<8x32xf32>
    %246 = vector.extract_strided_slice %167 {offsets = [32, 0], sizes = [8, 128], strides = [1, 1]} : vector<64x128xf32> to vector<8x128xf32>
    %cst_42 = arith.constant dense<0.000000e+00> : vector<8x128xf32>
    %247 = tpu.matmul %245, %163, %cst_42 {dimension_numbers = #tpu.dot_dimension_numbers<[1], [0], [0], [1], [0, 0, 1, 1], [], []>} : vector<8x32xf32>, vector<32x128xf32>, vector<8x128xf32> -> vector<8x128xf32>
    %248 = arith.addf %246, %247 : vector<8x128xf32>
    %249 = vector.extract_strided_slice %248 {offsets = [0, 0], sizes = [8, 96], strides = [1, 1]} : vector<8x128xf32> to vector<8x96xf32>
    %250 = arith.negf %249 : vector<8x96xf32>
    %251 = math.exp %250 : vector<8x96xf32>
    %cst_43 = arith.constant 1.000000e+00 : f32
    %252 = vector.broadcast %cst_43 : f32 to vector<8x96xf32>
    %253 = arith.addf %252, %251 : vector<8x96xf32>
    %254 = arith.divf %252, %253 : vector<8x96xf32>
    %255 = vector.extract_strided_slice %248 {offsets = [0, 96], sizes = [8, 32], strides = [1, 1]} : vector<8x128xf32> to vector<8x32xf32>
    %256 = math.tanh %255 : vector<8x32xf32>
    %257 = vector.extract_strided_slice %254 {offsets = [0, 0], sizes = [8, 32], strides = [1, 1]} : vector<8x96xf32> to vector<8x32xf32>
    %258 = vector.extract_strided_slice %254 {offsets = [0, 32], sizes = [8, 32], strides = [1, 1]} : vector<8x96xf32> to vector<8x32xf32>
    %259 = vector.extract_strided_slice %254 {offsets = [0, 64], sizes = [8, 32], strides = [1, 1]} : vector<8x96xf32> to vector<8x32xf32>
    %260 = arith.mulf %258, %243 : vector<8x32xf32>
    %261 = arith.mulf %257, %256 : vector<8x32xf32>
    %262 = arith.addf %260, %261 : vector<8x32xf32>
    %263 = math.tanh %262 : vector<8x32xf32>
    %264 = arith.mulf %259, %263 : vector<8x32xf32>
    %265 = vector.extract_strided_slice %167 {offsets = [40, 0], sizes = [8, 128], strides = [1, 1]} : vector<64x128xf32> to vector<8x128xf32>
    %cst_44 = arith.constant dense<0.000000e+00> : vector<8x128xf32>
    %266 = tpu.matmul %264, %163, %cst_44 {dimension_numbers = #tpu.dot_dimension_numbers<[1], [0], [0], [1], [0, 0, 1, 1], [], []>} : vector<8x32xf32>, vector<32x128xf32>, vector<8x128xf32> -> vector<8x128xf32>
    %267 = arith.addf %265, %266 : vector<8x128xf32>
    %268 = vector.extract_strided_slice %267 {offsets = [0, 0], sizes = [8, 96], strides = [1, 1]} : vector<8x128xf32> to vector<8x96xf32>
    %269 = arith.negf %268 : vector<8x96xf32>
    %270 = math.exp %269 : vector<8x96xf32>
    %cst_45 = arith.constant 1.000000e+00 : f32
    %271 = vector.broadcast %cst_45 : f32 to vector<8x96xf32>
    %272 = arith.addf %271, %270 : vector<8x96xf32>
    %273 = arith.divf %271, %272 : vector<8x96xf32>
    %274 = vector.extract_strided_slice %267 {offsets = [0, 96], sizes = [8, 32], strides = [1, 1]} : vector<8x128xf32> to vector<8x32xf32>
    %275 = math.tanh %274 : vector<8x32xf32>
    %276 = vector.extract_strided_slice %273 {offsets = [0, 0], sizes = [8, 32], strides = [1, 1]} : vector<8x96xf32> to vector<8x32xf32>
    %277 = vector.extract_strided_slice %273 {offsets = [0, 32], sizes = [8, 32], strides = [1, 1]} : vector<8x96xf32> to vector<8x32xf32>
    %278 = vector.extract_strided_slice %273 {offsets = [0, 64], sizes = [8, 32], strides = [1, 1]} : vector<8x96xf32> to vector<8x32xf32>
    %279 = arith.mulf %277, %262 : vector<8x32xf32>
    %280 = arith.mulf %276, %275 : vector<8x32xf32>
    %281 = arith.addf %279, %280 : vector<8x32xf32>
    %282 = math.tanh %281 : vector<8x32xf32>
    %283 = arith.mulf %278, %282 : vector<8x32xf32>
    %284 = vector.extract_strided_slice %167 {offsets = [48, 0], sizes = [8, 128], strides = [1, 1]} : vector<64x128xf32> to vector<8x128xf32>
    %cst_46 = arith.constant dense<0.000000e+00> : vector<8x128xf32>
    %285 = tpu.matmul %283, %163, %cst_46 {dimension_numbers = #tpu.dot_dimension_numbers<[1], [0], [0], [1], [0, 0, 1, 1], [], []>} : vector<8x32xf32>, vector<32x128xf32>, vector<8x128xf32> -> vector<8x128xf32>
    %286 = arith.addf %284, %285 : vector<8x128xf32>
    %287 = vector.extract_strided_slice %286 {offsets = [0, 0], sizes = [8, 96], strides = [1, 1]} : vector<8x128xf32> to vector<8x96xf32>
    %288 = arith.negf %287 : vector<8x96xf32>
    %289 = math.exp %288 : vector<8x96xf32>
    %cst_47 = arith.constant 1.000000e+00 : f32
    %290 = vector.broadcast %cst_47 : f32 to vector<8x96xf32>
    %291 = arith.addf %290, %289 : vector<8x96xf32>
    %292 = arith.divf %290, %291 : vector<8x96xf32>
    %293 = vector.extract_strided_slice %286 {offsets = [0, 96], sizes = [8, 32], strides = [1, 1]} : vector<8x128xf32> to vector<8x32xf32>
    %294 = math.tanh %293 : vector<8x32xf32>
    %295 = vector.extract_strided_slice %292 {offsets = [0, 0], sizes = [8, 32], strides = [1, 1]} : vector<8x96xf32> to vector<8x32xf32>
    %296 = vector.extract_strided_slice %292 {offsets = [0, 32], sizes = [8, 32], strides = [1, 1]} : vector<8x96xf32> to vector<8x32xf32>
    %297 = vector.extract_strided_slice %292 {offsets = [0, 64], sizes = [8, 32], strides = [1, 1]} : vector<8x96xf32> to vector<8x32xf32>
    %298 = arith.mulf %296, %281 : vector<8x32xf32>
    %299 = arith.mulf %295, %294 : vector<8x32xf32>
    %300 = arith.addf %298, %299 : vector<8x32xf32>
    %301 = math.tanh %300 : vector<8x32xf32>
    %302 = arith.mulf %297, %301 : vector<8x32xf32>
    %303 = vector.extract_strided_slice %167 {offsets = [56, 0], sizes = [8, 128], strides = [1, 1]} : vector<64x128xf32> to vector<8x128xf32>
    %cst_48 = arith.constant dense<0.000000e+00> : vector<8x128xf32>
    %304 = tpu.matmul %302, %163, %cst_48 {dimension_numbers = #tpu.dot_dimension_numbers<[1], [0], [0], [1], [0, 0, 1, 1], [], []>} : vector<8x32xf32>, vector<32x128xf32>, vector<8x128xf32> -> vector<8x128xf32>
    %305 = arith.addf %303, %304 : vector<8x128xf32>
    %306 = vector.extract_strided_slice %305 {offsets = [0, 0], sizes = [8, 96], strides = [1, 1]} : vector<8x128xf32> to vector<8x96xf32>
    %307 = arith.negf %306 : vector<8x96xf32>
    %308 = math.exp %307 : vector<8x96xf32>
    %cst_49 = arith.constant 1.000000e+00 : f32
    %309 = vector.broadcast %cst_49 : f32 to vector<8x96xf32>
    %310 = arith.addf %309, %308 : vector<8x96xf32>
    %311 = arith.divf %309, %310 : vector<8x96xf32>
    %312 = vector.extract_strided_slice %305 {offsets = [0, 96], sizes = [8, 32], strides = [1, 1]} : vector<8x128xf32> to vector<8x32xf32>
    %313 = math.tanh %312 : vector<8x32xf32>
    %314 = vector.extract_strided_slice %311 {offsets = [0, 0], sizes = [8, 32], strides = [1, 1]} : vector<8x96xf32> to vector<8x32xf32>
    %315 = vector.extract_strided_slice %311 {offsets = [0, 32], sizes = [8, 32], strides = [1, 1]} : vector<8x96xf32> to vector<8x32xf32>
    %316 = vector.extract_strided_slice %311 {offsets = [0, 64], sizes = [8, 32], strides = [1, 1]} : vector<8x96xf32> to vector<8x32xf32>
    %317 = arith.mulf %315, %300 : vector<8x32xf32>
    %318 = arith.mulf %314, %313 : vector<8x32xf32>
    %319 = arith.addf %317, %318 : vector<8x32xf32>
    %320 = math.tanh %319 : vector<8x32xf32>
    %321 = arith.mulf %316, %320 : vector<8x32xf32>
    %c0_50 = arith.constant 0 : index
    %c0_51 = arith.constant 0 : index
    %322 = vector.load %arg7[%c0_50, %c0_51] : memref<32x12xf32, #tpu.memory_space<vmem>>, vector<32x12xf32>
    %cst_52 = arith.constant dense<0.000000e+00> : vector<8x12xf32>
    %323 = tpu.matmul %321, %322, %cst_52 {dimension_numbers = #tpu.dot_dimension_numbers<[1], [0], [0], [1], [0, 0, 1, 1], [], []>} : vector<8x32xf32>, vector<32x12xf32>, vector<8x12xf32> -> vector<8x12xf32>
    %c0_53 = arith.constant 0 : index
    %c0_54 = arith.constant 0 : index
    %324 = vector.load %arg8[%c0_53, %c0_54] : memref<1x12xf32, #tpu.memory_space<vmem>>, vector<1x12xf32>
    %325 = vector.broadcast %324 : vector<1x12xf32> to vector<8x12xf32>
    %326 = arith.addf %323, %325 : vector<8x12xf32>
    %c0_55 = arith.constant 0 : index
    %c0_56 = arith.constant 0 : index
    %327 = vector.load %arg9[%c0_55, %c0_56] : memref<8x12xf32, #tpu.memory_space<vmem>>, vector<8x12xf32>
    tpu.vector_store %arg9[%c0_55, %c0_56], %326 {strides = array<i32>} : memref<8x12xf32, #tpu.memory_space<vmem>>, vector<8x12xf32>,
    return
  }
}

</mosaic_0001>

<llo_original>
// kernel: tpu_custom_call.1
$region0: #{tpu_custom_call.1}
  #allocation0 [shape = 'u32[]', space=smem, size = 0x4, offset = 0x4, fixed_abs, tag = 'smem constant byte address 0x4 - core index']
  #allocation1 [shape = 'u32[144,128]{1,0:T(1,128)}', space=vmem, size = 0x12000, scoped, tag = 'internal scratch']
  %s0 = inlined_call_operand.vmem [shape: f32[64,4], index: 0, kind: input, shape index: {}]
  %s1 = inlined_call_operand.vmem [shape: f32[4,128], index: 1, kind: input, shape index: {}]
  %s2 = inlined_call_operand.vmem [shape: f32[32,128], index: 2, kind: input, shape index: {}]
  %s3 = inlined_call_operand.vmem [shape: f32[1,128], index: 3, kind: input, shape index: {}]
  %s4 = inlined_call_operand.vmem [shape: f32[32,128], index: 4, kind: input, shape index: {}]
  %s5 = inlined_call_operand.vmem [shape: f32[32,128], index: 5, kind: input, shape index: {}]
  %s6 = inlined_call_operand.vmem [shape: f32[1,128], index: 6, kind: input, shape index: {}]
  %s7 = inlined_call_operand.vmem [shape: f32[32,12], index: 7, kind: input, shape index: {}]
  %s8 = inlined_call_operand.vmem [shape: f32[1,12], index: 8, kind: input, shape index: {}]
  %s9 = inlined_call_operand.hbm [shape: f32[8,12], index: 9, kind: output, shape index: {}]
  %s10 = sld [smem:[#allocation0]]
  $region46: #{tpu_custom_call.1} parent=0
    _
  %s12 = ssub.s32 1, %s10
  %s13 = scalar_select 0, %s12, %s10
  $region1: #{tpu_custom_call.1} parent=0
    #allocation2 [shape = 'u8[4096]{0}', space=vmem, size = 0x1000, scoped, tag = 'output window, operand 0, single buffered']
    #allocation3 [shape = 's32[1]{0}', space=sflag, size = 0x4, scoped, tag = 'scoped memory for tpu_custom_call.1']
    %14 = vsyncpa [#allocation3], 0
    // Predicated region
    $region2: #{tpu_custom_call.1} parent=1 // pred_check
      _
    $region3: #{tpu_custom_call.1} parent=1 // pred_check_branch
      %16 = sbr.rel (0) target = $region5
    $region4: #{tpu_custom_call.1} parent=1 // pred_region
      _
    $region5: #{tpu_custom_call.1} parent=1 // pred_fallthru
      _
    // Predicated region
    $region6: #{tpu_custom_call.1} parent=1 // pred_check
      _
    $region7: #{tpu_custom_call.1} parent=1 // pred_check_branch
      %18 = sbr.rel (0) target = $region9
    $region8: #{tpu_custom_call.1} parent=1 // pred_region
      _
    $region9: #{tpu_custom_call.1} parent=1 // pred_fallthru
      _
    // Predicated region
    $region10: #{tpu_custom_call.1} parent=1 // pred_check
      _
    $region11: #{tpu_custom_call.1} parent=1 // pred_check_branch
      %20 = sbr.rel (0) target = $region13
    $region12: #{tpu_custom_call.1} parent=1 // pred_region
      _
    $region13: #{tpu_custom_call.1} parent=1 // pred_fallthru
      _
    // Predicated region
    $region14: #{tpu_custom_call.1} parent=1 // pred_check
      _
    $region15: #{tpu_custom_call.1} parent=1 // pred_check_branch
      %22 = sbr.rel (0) target = $region17
    $region16: #{tpu_custom_call.1} parent=1 // pred_region
      _
    $region17: #{tpu_custom_call.1} parent=1 // pred_fallthru
      _
    // Predicated region
    $region18: #{tpu_custom_call.1} parent=1 // pred_check
      _
    $region19: #{tpu_custom_call.1} parent=1 // pred_check_branch
      %24 = sbr.rel (0) target = $region21
    $region20: #{tpu_custom_call.1} parent=1 // pred_region
      _
    $region21: #{tpu_custom_call.1} parent=1 // pred_fallthru
      _
    // Predicated region
    $region22: #{tpu_custom_call.1} parent=1 // pred_check
      _
    $region23: #{tpu_custom_call.1} parent=1 // pred_check_branch
      %26 = sbr.rel (0) target = $region25
    $region24: #{tpu_custom_call.1} parent=1 // pred_region
      _
    $region25: #{tpu_custom_call.1} parent=1 // pred_fallthru
      _
    // Predicated region
    $region26: #{tpu_custom_call.1} parent=1 // pred_check
      _
    $region27: #{tpu_custom_call.1} parent=1 // pred_check_branch
      %28 = sbr.rel (0) target = $region29
    $region28: #{tpu_custom_call.1} parent=1 // pred_region
      _
    $region29: #{tpu_custom_call.1} parent=1 // pred_fallthru
      _
    // Predicated region
    $region30: #{tpu_custom_call.1} parent=1 // pred_check
      _
    $region31: #{tpu_custom_call.1} parent=1 // pred_check_branch
      %30 = sbr.rel (0) target = $region33
    $region32: #{tpu_custom_call.1} parent=1 // pred_region
      _
    $region33: #{tpu_custom_call.1} parent=1 // pred_fallthru
      _
    // Predicated region
    $region34: #{tpu_custom_call.1} parent=1 // pred_check
      _
    $region35: #{tpu_custom_call.1} parent=1 // pred_check_branch
      %32 = sbr.rel (0) target = $region37
    $region36: #{tpu_custom_call.1} parent=1 // pred_region
      _
    $region37: #{tpu_custom_call.1} parent=1 // pred_fallthru
      _
    %v33 = vld [vmem:[%s0] sm:$0xff]
    %v34 = vld [vmem:[%s0 + $0x8] sm:$0xff]
    %v35 = vld [vmem:[%s0 + $0x10] sm:$0xff]
    %v36 = vld [vmem:[%s0 + $0x18] sm:$0xff]
    %v37 = vld [vmem:[%s0 + $0x20] sm:$0xff]
    %v38 = vld [vmem:[%s0 + $0x28] sm:$0xff]
    %v39 = vld [vmem:[%s0 + $0x30] sm:$0xff]
    %v40 = vld [vmem:[%s0 + $0x38] sm:$0xff]
    %v41 = vld [vmem:[%s1] sm:$0xf]
    %v42 = vld [vmem:[%s2] sm:$0xff]
    %v43 = vld [vmem:[%s2 + $0x8] sm:$0xff]
    %v44 = vld [vmem:[%s2 + $0x10] sm:$0xff]
    %v45 = vld [vmem:[%s2 + $0x18] sm:$0xff]
    %v46 = vld [vmem:[%s3] sm:$0x1]
    %v48 = vlaneseq
    %v49 = vshrl.u32 %v48, 7
    %v50 = vsub.s32 0, %v49
    %v51 = vrot.slane %v46, %v50
    %vm53 = vcmask 31744
    %v55 = vsel %vm53, %v33, 0
    %v58 = vsel %vm53, %v34, 0
    %v61 = vsel %vm53, %v35, 0
    %v64 = vsel %vm53, %v36, 0
    %v67 = vsel %vm53, %v37, 0
    %v70 = vsel %vm53, %v38, 0
    %v73 = vsel %vm53, %v39, 0
    %v76 = vsel %vm53, %v40, 0
    %vm78 = vcmask 1043456
    %v80 = vsel %vm78, %v41, 0
    %82 = vmatprep.subr.mxu0 0.0
    %83 = vmatpush1.msra.mxu0 0.0
    %84 = vmatprep.subr.mxu0 0.0
    %85 = vmatpush1.msra.mxu0 0.0
    %86 = vmatprep.subr.mxu0 0.0
    %87 = vmatpush1.msra.mxu0 0.0
    %88 = vmatprep.subr.mxu0 0.0
    %89 = vmatpush1.msra.mxu0 0.0
    %90 = vmatprep.subr.mxu0 0.0
    %91 = vmatpush1.msra.mxu0 0.0
    %92 = vmatprep.subr.mxu0 0.0
    %93 = vmatpush1.msra.mxu0 0.0
    %94 = vmatprep.subr.mxu0 0.0
    %95 = vmatpush1.msra.mxu0 0.0
    %96 = vmatprep.subr.mxu0 0.0
    %97 = vmatpush1.msra.mxu0 0.0
    %98 = vmatprep.subr.mxu0 0.0
    %99 = vmatpush1.msra.mxu0 0.0
    %100 = vmatprep.subr.mxu0 0.0
    %101 = vmatpush1.msra.mxu0 0.0
    %102 = vmatprep.subr.mxu0 0.0
    %103 = vmatpush1.msra.mxu0 0.0
    %104 = vmatprep.subr.mxu0 0.0
    %105 = vmatpush1.msra.mxu0 0.0
    %106 = vmatprep.subr.mxu0 0.0
    %107 = vmatpush1.msra.mxu0 0.0
    %108 = vmatprep.subr.mxu0 0.0
    %109 = vmatpush1.msra.mxu0 0.0
    %110 = vmatprep.subr.mxu0 0.0
    %111 = vmatpush1.msra.mxu0 0.0
    %112 = vmatprep.subr.mxu0 0.0
    %113 = vmatpush1.msra.mxu0 %v80
    %114 = vmatprep.subr.mxu0 0.0
    %115 = vmatpush2.msra.mxu0 0.0
    %116 = vmatprep.subr.mxu0 0.0
    %117 = vmatpush2.msra.mxu0 0.0
    %118 = vmatprep.subr.mxu0 0.0
    %119 = vmatpush2.msra.mxu0 0.0
    %120 = vmatprep.subr.mxu0 0.0
    %121 = vmatpush2.msra.mxu0 0.0
    %122 = vmatprep.subr.mxu0 0.0
    %123 = vmatpush2.msra.mxu0 0.0
    %124 = vmatprep.subr.mxu0 0.0
    %125 = vmatpush2.msra.mxu0 0.0
    %126 = vmatprep.subr.mxu0 0.0
    %127 = vmatpush2.msra.mxu0 0.0
    %128 = vmatprep.subr.mxu0 0.0
    %129 = vmatpush2.msra.mxu0 0.0
    %130 = vmatprep.subr.mxu0 0.0
    %131 = vmatpush2.msra.mxu0 0.0
    %132 = vmatprep.subr.mxu0 0.0
    %133 = vmatpush2.msra.mxu0 0.0
    %134 = vmatprep.subr.mxu0 0.0
    %135 = vmatpush2.msra.mxu0 0.0
    %136 = vmatprep.subr.mxu0 0.0
    %137 = vmatpush2.msra.mxu0 0.0
    %138 = vmatprep.subr.mxu0 0.0
    %139 = vmatpush2.msra.mxu0 0.0
    %140 = vmatprep.subr.mxu0 0.0
    %141 = vmatpush2.msra.mxu0 0.0
    %142 = vmatprep.subr.mxu0 0.0
    %143 = vmatpush2.msra.mxu0 0.0
    %144 = vmatprep.subr.mxu0 0.0
    %145 = vmatpush2.msra.mxu0 0.0
    %146 = vmatprep.mubr.f32.mxu0 0.0
    %147 = vmatmul.mubr.f32.gmra.mxu0 %v55
    %v148 = vpop.f32.mrf.mxu0
    %v149 = vadd.f32 %v51, %v148
    %v150 = vpop.f32.mrf.mxu0
    %151 = vmatprep.mubr.f32.mxu0 0.0
    %152 = vmatmul.mubr.f32.gmra.mxu0 %v58
    %v153 = vpop.f32.mrf.mxu0
    %v154 = vadd.f32 %v51, %v153
    %v155 = vpop.f32.mrf.mxu0
    %156 = vmatprep.mubr.f32.mxu0 0.0
    %157 = vmatmul.mubr.f32.gmra.mxu0 %v61
    %v158 = vpop.f32.mrf.mxu0
    %v159 = vadd.f32 %v51, %v158
    %v160 = vpop.f32.mrf.mxu0
    %161 = vmatprep.mubr.f32.mxu0 0.0
    %162 = vmatmul.mubr.f32.gmra.mxu0 %v64
    %v163 = vpop.f32.mrf.mxu0
    %v164 = vadd.f32 %v51, %v163
    %v165 = vpop.f32.mrf.mxu0
    %166 = vmatprep.mubr.f32.mxu0 0.0
    %167 = vmatmul.mubr.f32.gmra.mxu0 %v67
    %v168 = vpop.f32.mrf.mxu0
    %v169 = vadd.f32 %v51, %v168
    %v170 = vpop.f32.mrf.mxu0
    %171 = vmatprep.mubr.f32.mxu0 0.0
    %172 = vmatmul.mubr.f32.gmra.mxu0 %v70
    %v173 = vpop.f32.mrf.mxu0
    %v174 = vadd.f32 %v51, %v173
    %v175 = vpop.f32.mrf.mxu0
    %176 = vmatprep.mubr.f32.mxu0 0.0
    %177 = vmatmul.mubr.f32.gmra.mxu0 %v73
    %v178 = vpop.f32.mrf.mxu0
    %v179 = vadd.f32 %v51, %v178
    %v180 = vpop.f32.mrf.mxu0
    %181 = vmatprep.mubr.f32.mxu0 0.0
    %182 = vmatmul.mubr.f32.gmra.mxu0 %v76
    %v183 = vpop.f32.mrf.mxu0
    %v184 = vadd.f32 %v51, %v183
    %v185 = vpop.f32.mrf.mxu0
    %186 = vdwg.mxu0
    %vm187 = vcmask 261120
    %v189 = vsel %vm187, 0.0, 0
    %191 = vmatprep.subr.mxu0 0.0
    %192 = vmatpush1.msra.mxu0 0.0
    %193 = vmatprep.subr.mxu0 0.0
    %194 = vmatpush1.msra.mxu0 0.0
    %195 = vmatprep.subr.mxu0 0.0
    %196 = vmatpush1.msra.mxu0 0.0
    %197 = vmatprep.subr.mxu0 0.0
    %198 = vmatpush1.msra.mxu0 0.0
    %199 = vmatprep.subr.mxu0 0.0
    %200 = vmatpush1.msra.mxu0 0.0
    %201 = vmatprep.subr.mxu0 0.0
    %202 = vmatpush1.msra.mxu0 0.0
    %203 = vmatprep.subr.mxu0 0.0
    %204 = vmatpush1.msra.mxu0 0.0
    %205 = vmatprep.subr.mxu0 0.0
    %206 = vmatpush1.msra.mxu0 0.0
    %207 = vmatprep.subr.mxu0 0.0
    %208 = vmatpush1.msra.mxu0 0.0
    %209 = vmatprep.subr.mxu0 0.0
    %210 = vmatpush1.msra.mxu0 0.0
    %211 = vmatprep.subr.mxu0 0.0
    %212 = vmatpush1.msra.mxu0 0.0
    %213 = vmatprep.subr.mxu0 0.0
    %214 = vmatpush1.msra.mxu0 0.0
    %215 = vmatprep.subr.mxu0 0.0
    %216 = vmatpush1.msra.mxu0 %v45
    %217 = vmatprep.subr.mxu0 0.0
    %218 = vmatpush1.msra.mxu0 %v44
    %219 = vmatprep.subr.mxu0 0.0
    %220 = vmatpush1.msra.mxu0 %v43
    %221 = vmatprep.subr.mxu0 0.0
    %222 = vmatpush1.msra.mxu0 %v42
    %223 = vmatprep.subr.mxu0 0.0
    %224 = vmatpush2.msra.mxu0 0.0
    %225 = vmatprep.subr.mxu0 0.0
    %226 = vmatpush2.msra.mxu0 0.0
    %227 = vmatprep.subr.mxu0 0.0
    %228 = vmatpush2.msra.mxu0 0.0
    %229 = vmatprep.subr.mxu0 0.0
    %230 = vmatpush2.msra.mxu0 0.0
    %231 = vmatprep.subr.mxu0 0.0
    %232 = vmatpush2.msra.mxu0 0.0
    %233 = vmatprep.subr.mxu0 0.0
    %234 = vmatpush2.msra.mxu0 0.0
    %235 = vmatprep.subr.mxu0 0.0
    %236 = vmatpush2.msra.mxu0 0.0
    %237 = vmatprep.subr.mxu0 0.0
    %238 = vmatpush2.msra.mxu0 0.0
    %239 = vmatprep.subr.mxu0 0.0
    %240 = vmatpush2.msra.mxu0 0.0
    %241 = vmatprep.subr.mxu0 0.0
    %242 = vmatpush2.msra.mxu0 0.0
    %243 = vmatprep.subr.mxu0 0.0
    %244 = vmatpush2.msra.mxu0 0.0
    %245 = vmatprep.subr.mxu0 0.0
    %246 = vmatpush2.msra.mxu0 0.0
    %247 = vmatprep.subr.mxu0 0.0
    %248 = vmatpush2.msra.mxu0 0.0
    %249 = vmatprep.subr.mxu0 0.0
    %250 = vmatpush2.msra.mxu0 0.0
    %251 = vmatprep.subr.mxu0 0.0
    %252 = vmatpush2.msra.mxu0 0.0
    %253 = vmatprep.subr.mxu0 0.0
    %254 = vmatpush2.msra.mxu0 0.0
    %255 = vmatprep.mubr.f32.mxu0 0.0
    %256 = vmatmul.mubr.f32.gmra.mxu0 %v189
    %v257 = vpop.f32.mrf.mxu0
    %v258 = vadd.f32 0.0, %v257
    %v259 = vpop.f32.mrf.mxu0
    %260 = vdwg.mxu0
    %v261 = vadd.f32 %v149, %v258
    %v262 = vxor.u32 %v261, 2147483648
    %v263 = vmul.f32 %v262, 1.442695
    %v264 = vpow.pop %v263
    %v265 = vadd.f32 %v264, 1.0
    %v266 = vrcp.pop %v265
    %v267 = vmul.f32 1.0, %v266
    %v268 = vtanh.pop %v261
    %v269 = vmul.f32 %v267, 0.0
    %271 = vrot.lane.b32.xlu0 %v268, 32
    %v272 = vpop.permute.xlu0 %271
    %v274 = vmul.f32 %v267, %v272
    %276 = vrot.lane.b32.xlu0 %v274, 32
    %v277 = vpop.permute.xlu0 %276
    %v279 = vadd.f32 %v269, %v277
    %v280 = vtanh.pop %v279
    %282 = vrot.lane.b32.xlu0 %v280, 32
    %v283 = vpop.permute.xlu0 %282
    %v285 = vmul.f32 %v267, %v283
    %287 = vrot.lane.b32.xlu0 %v285, 64
    %v288 = vpop.permute.xlu0 %287
    %v289 = vsel %vm187, %v288, 0
    %291 = vmatprep.subr.mxu0 0.0
    %292 = vmatpush1.msra.mxu0 0.0
    %293 = vmatprep.subr.mxu0 0.0
    %294 = vmatpush1.msra.mxu0 0.0
    %295 = vmatprep.subr.mxu0 0.0
    %296 = vmatpush1.msra.mxu0 0.0
    %297 = vmatprep.subr.mxu0 0.0
    %298 = vmatpush1.msra.mxu0 0.0
    %299 = vmatprep.subr.mxu0 0.0
    %300 = vmatpush1.msra.mxu0 0.0
    %301 = vmatprep.subr.mxu0 0.0
    %302 = vmatpush1.msra.mxu0 0.0
    %303 = vmatprep.subr.mxu0 0.0
    %304 = vmatpush1.msra.mxu0 0.0
    %305 = vmatprep.subr.mxu0 0.0
    %306 = vmatpush1.msra.mxu0 0.0
    %307 = vmatprep.subr.mxu0 0.0
    %308 = vmatpush1.msra.mxu0 0.0
    %309 = vmatprep.subr.mxu0 0.0
    %310 = vmatpush1.msra.mxu0 0.0
    %311 = vmatprep.subr.mxu0 0.0
    %312 = vmatpush1.msra.mxu0 0.0
    %313 = vmatprep.subr.mxu0 0.0
    %314 = vmatpush1.msra.mxu0 0.0
    %315 = vmatprep.subr.mxu0 0.0
    %316 = vmatpush1.msra.mxu0 %v45
    %317 = vmatprep.subr.mxu0 0.0
    %318 = vmatpush1.msra.mxu0 %v44
    %319 = vmatprep.subr.mxu0 0.0
    %320 = vmatpush1.msra.mxu0 %v43
    %321 = vmatprep.subr.mxu0 0.0
    %322 = vmatpush1.msra.mxu0 %v42
    %323 = vmatprep.subr.mxu0 0.0
    %324 = vmatpush2.msra.mxu0 0.0
    %325 = vmatprep.subr.mxu0 0.0
    %326 = vmatpush2.msra.mxu0 0.0
    %327 = vmatprep.subr.mxu0 0.0
    %328 = vmatpush2.msra.mxu0 0.0
    %329 = vmatprep.subr.mxu0 0.0
    %330 = vmatpush2.msra.mxu0 0.0
    %331 = vmatprep.subr.mxu0 0.0
    %332 = vmatpush2.msra.mxu0 0.0
    %333 = vmatprep.subr.mxu0 0.0
    %334 = vmatpush2.msra.mxu0 0.0
    %335 = vmatprep.subr.mxu0 0.0
    %336 = vmatpush2.msra.mxu0 0.0
    %337 = vmatprep.subr.mxu0 0.0
    %338 = vmatpush2.msra.mxu0 0.0
    %339 = vmatprep.subr.mxu0 0.0
    %340 = vmatpush2.msra.mxu0 0.0
    %341 = vmatprep.subr.mxu0 0.0
    %342 = vmatpush2.msra.mxu0 0.0
    %343 = vmatprep.subr.mxu0 0.0
    %344 = vmatpush2.msra.mxu0 0.0
    %345 = vmatprep.subr.mxu0 0.0
    %346 = vmatpush2.msra.mxu0 0.0
    %347 = vmatprep.subr.mxu0 0.0
    %348 = vmatpush2.msra.mxu0 0.0
    %349 = vmatprep.subr.mxu0 0.0
    %350 = vmatpush2.msra.mxu0 0.0
    %351 = vmatprep.subr.mxu0 0.0
    %352 = vmatpush2.msra.mxu0 0.0
    %353 = vmatprep.subr.mxu0 0.0
    %354 = vmatpush2.msra.mxu0 0.0
    %355 = vmatprep.mubr.f32.mxu0 0.0
    %356 = vmatmul.mubr.f32.gmra.mxu0 %v289
    %v357 = vpop.f32.mrf.mxu0
    %v358 = vadd.f32 0.0, %v357
    %v359 = vpop.f32.mrf.mxu0
    %360 = vdwg.mxu0
    %v361 = vadd.f32 %v154, %v358
    %v362 = vxor.u32 %v361, 2147483648
    %v363 = vmul.f32 %v362, 1.442695
    %v364 = vpow.pop %v363
    %v365 = vadd.f32 %v364, 1.0
    %v366 = vrcp.pop %v365
    %v367 = vmul.f32 1.0, %v366
    %v368 = vtanh.pop %v361
    %v369 = vmul.f32 %v367, %v279
    %371 = vrot.lane.b32.xlu0 %v368, 32
    %v372 = vpop.permute.xlu0 %371
    %v374 = vmul.f32 %v367, %v372
    %376 = vrot.lane.b32.xlu0 %v374, 32
    %v377 = vpop.permute.xlu0 %376
    %v379 = vadd.f32 %v369, %v377
    %v380 = vtanh.pop %v379
    %382 = vrot.lane.b32.xlu0 %v380, 32
    %v383 = vpop.permute.xlu0 %382
    %v385 = vmul.f32 %v367, %v383
    %387 = vrot.lane.b32.xlu0 %v385, 64
    %v388 = vpop.permute.xlu0 %387
    %v389 = vsel %vm187, %v388, 0
    %391 = vmatprep.subr.mxu0 0.0
    %392 = vmatpush1.msra.mxu0 0.0
    %393 = vmatprep.subr.mxu0 0.0
    %394 = vmatpush1.msra.mxu0 0.0
    %395 = vmatprep.subr.mxu0 0.0
    %396 = vmatpush1.msra.mxu0 0.0
    %397 = vmatprep.subr.mxu0 0.0
    %398 = vmatpush1.msra.mxu0 0.0
    %399 = vmatprep.subr.mxu0 0.0
    %400 = vmatpush1.msra.mxu0 0.0
    %401 = vmatprep.subr.mxu0 0.0
    %402 = vmatpush1.msra.mxu0 0.0
    %403 = vmatprep.subr.mxu0 0.0
    %404 = vmatpush1.msra.mxu0 0.0
    %405 = vmatprep.subr.mxu0 0.0
    %406 = vmatpush1.msra.mxu0 0.0
    %407 = vmatprep.subr.mxu0 0.0
    %408 = vmatpush1.msra.mxu0 0.0
    %409 = vmatprep.subr.mxu0 0.0
    %410 = vmatpush1.msra.mxu0 0.0
    %411 = vmatprep.subr.mxu0 0.0
    %412 = vmatpush1.msra.mxu0 0.0
    %413 = vmatprep.subr.mxu0 0.0
    %414 = vmatpush1.msra.mxu0 0.0
    %415 = vmatprep.subr.mxu0 0.0
    %416 = vmatpush1.msra.mxu0 %v45
    %417 = vmatprep.subr.mxu0 0.0
    %418 = vmatpush1.msra.mxu0 %v44
    %419 = vmatprep.subr.mxu0 0.0
    %420 = vmatpush1.msra.mxu0 %v43
    %421 = vmatprep.subr.mxu0 0.0
    %422 = vmatpush1.msra.mxu0 %v42
    %423 = vmatprep.subr.mxu0 0.0
    %424 = vmatpush2.msra.mxu0 0.0
    %425 = vmatprep.subr.mxu0 0.0
    %426 = vmatpush2.msra.mxu0 0.0
    %427 = vmatprep.subr.mxu0 0.0
    %428 = vmatpush2.msra.mxu0 0.0
    %429 = vmatprep.subr.mxu0 0.0
    %430 = vmatpush2.msra.mxu0 0.0
    %431 = vmatprep.subr.mxu0 0.0
    %432 = vmatpush2.msra.mxu0 0.0
    %433 = vmatprep.subr.mxu0 0.0
    %434 = vmatpush2.msra.mxu0 0.0
    %435 = vmatprep.subr.mxu0 0.0
    %436 = vmatpush2.msra.mxu0 0.0
    %437 = vmatprep.subr.mxu0 0.0
    %438 = vmatpush2.msra.mxu0 0.0
    %439 = vmatprep.subr.mxu0 0.0
    %440 = vmatpush2.msra.mxu0 0.0
    %441 = vmatprep.subr.mxu0 0.0
    %442 = vmatpush2.msra.mxu0 0.0
    %443 = vmatprep.subr.mxu0 0.0
    %444 = vmatpush2.msra.mxu0 0.0
    %445 = vmatprep.subr.mxu0 0.0
    %446 = vmatpush2.msra.mxu0 0.0
    %447 = vmatprep.subr.mxu0 0.0
    %448 = vmatpush2.msra.mxu0 0.0
    %449 = vmatprep.subr.mxu0 0.0
    %450 = vmatpush2.msra.mxu0 0.0
    %451 = vmatprep.subr.mxu0 0.0
    %452 = vmatpush2.msra.mxu0 0.0
    %453 = vmatprep.subr.mxu0 0.0
    %454 = vmatpush2.msra.mxu0 0.0
    %455 = vmatprep.mubr.f32.mxu0 0.0
    %456 = vmatmul.mubr.f32.gmra.mxu0 %v389
    %v457 = vpop.f32.mrf.mxu0
    %v458 = vadd.f32 0.0, %v457
    %v459 = vpop.f32.mrf.mxu0
    %460 = vdwg.mxu0
    %v461 = vadd.f32 %v159, %v458
    %v462 = vxor.u32 %v461, 2147483648
    %v463 = vmul.f32 %v462, 1.442695
    %v464 = vpow.pop %v463
    %v465 = vadd.f32 %v464, 1.0
    %v466 = vrcp.pop %v465
    %v467 = vmul.f32 1.0, %v466
    %v468 = vtanh.pop %v461
    %v469 = vmul.f32 %v467, %v379
    %471 = vrot.lane.b32.xlu0 %v468, 32
    %v472 = vpop.permute.xlu0 %471
    %v474 = vmul.f32 %v467, %v472
    %476 = vrot.lane.b32.xlu0 %v474, 32
    %v477 = vpop.permute.xlu0 %476
    %v479 = vadd.f32 %v469, %v477
    %v480 = vtanh.pop %v479
    %482 = vrot.lane.b32.xlu0 %v480, 32
    %v483 = vpop.permute.xlu0 %482
    %v485 = vmul.f32 %v467, %v483
    %487 = vrot.lane.b32.xlu0 %v485, 64
    %v488 = vpop.permute.xlu0 %487
    %v489 = vsel %vm187, %v488, 0
    %491 = vmatprep.subr.mxu0 0.0
    %492 = vmatpush1.msra.mxu0 0.0
    %493 = vmatprep.subr.mxu0 0.0
    %494 = vmatpush1.msra.mxu0 0.0
    %495 = vmatprep.subr.mxu0 0.0
    %496 = vmatpush1.msra.mxu0 0.0
    %497 = vmatprep.subr.mxu0 0.0
    %498 = vmatpush1.msra.mxu0 0.0
    %499 = vmatprep.subr.mxu0 0.0
    %500 = vmatpush1.msra.mxu0 0.0
    %501 = vmatprep.subr.mxu0 0.0
    %502 = vmatpush1.msra.mxu0 0.0
    %503 = vmatprep.subr.mxu0 0.0
    %504 = vmatpush1.msra.mxu0 0.0
    %505 = vmatprep.subr.mxu0 0.0
    %506 = vmatpush1.msra.mxu0 0.0
    %507 = vmatprep.subr.mxu0 0.0
    %508 = vmatpush1.msra.mxu0 0.0
    %509 = vmatprep.subr.mxu0 0.0
    %510 = vmatpush1.msra.mxu0 0.0
    %511 = vmatprep.subr.mxu0 0.0
    %512 = vmatpush1.msra.mxu0 0.0
    %513 = vmatprep.subr.mxu0 0.0
    %514 = vmatpush1.msra.mxu0 0.0
    %515 = vmatprep.subr.mxu0 0.0
    %516 = vmatpush1.msra.mxu0 %v45
    %517 = vmatprep.subr.mxu0 0.0
    %518 = vmatpush1.msra.mxu0 %v44
    %519 = vmatprep.subr.mxu0 0.0
    %520 = vmatpush1.msra.mxu0 %v43
    %521 = vmatprep.subr.mxu0 0.0
    %522 = vmatpush1.msra.mxu0 %v42
    %523 = vmatprep.subr.mxu0 0.0
    %524 = vmatpush2.msra.mxu0 0.0
    %525 = vmatprep.subr.mxu0 0.0
    %526 = vmatpush2.msra.mxu0 0.0
    %527 = vmatprep.subr.mxu0 0.0
    %528 = vmatpush2.msra.mxu0 0.0
    %529 = vmatprep.subr.mxu0 0.0
    %530 = vmatpush2.msra.mxu0 0.0
    %531 = vmatprep.subr.mxu0 0.0
    %532 = vmatpush2.msra.mxu0 0.0
    %533 = vmatprep.subr.mxu0 0.0
    %534 = vmatpush2.msra.mxu0 0.0
    %535 = vmatprep.subr.mxu0 0.0
    %536 = vmatpush2.msra.mxu0 0.0
    %537 = vmatprep.subr.mxu0 0.0
    %538 = vmatpush2.msra.mxu0 0.0
    %539 = vmatprep.subr.mxu0 0.0
    %540 = vmatpush2.msra.mxu0 0.0
    %541 = vmatprep.subr.mxu0 0.0
    %542 = vmatpush2.msra.mxu0 0.0
    %543 = vmatprep.subr.mxu0 0.0
    %544 = vmatpush2.msra.mxu0 0.0
    %545 = vmatprep.subr.mxu0 0.0
    %546 = vmatpush2.msra.mxu0 0.0
    %547 = vmatprep.subr.mxu0 0.0
    %548 = vmatpush2.msra.mxu0 0.0
    %549 = vmatprep.subr.mxu0 0.0
    %550 = vmatpush2.msra.mxu0 0.0
    %551 = vmatprep.subr.mxu0 0.0
    %552 = vmatpush2.msra.mxu0 0.0
    %553 = vmatprep.subr.mxu0 0.0
    %554 = vmatpush2.msra.mxu0 0.0
    %555 = vmatprep.mubr.f32.mxu0 0.0
    %556 = vmatmul.mubr.f32.gmra.mxu0 %v489
    %v557 = vpop.f32.mrf.mxu0
    %v558 = vadd.f32 0.0, %v557
    %v559 = vpop.f32.mrf.mxu0
    %560 = vdwg.mxu0
    %v561 = vadd.f32 %v164, %v558
    %v562 = vxor.u32 %v561, 2147483648
    %v563 = vmul.f32 %v562, 1.442695
    %v564 = vpow.pop %v563
    %v565 = vadd.f32 %v564, 1.0
    %v566 = vrcp.pop %v565
    %v567 = vmul.f32 1.0, %v566
    %v568 = vtanh.pop %v561
    %v569 = vmul.f32 %v567, %v479
    %571 = vrot.lane.b32.xlu0 %v568, 32
    %v572 = vpop.permute.xlu0 %571
    %v574 = vmul.f32 %v567, %v572
    %576 = vrot.lane.b32.xlu0 %v574, 32
    %v577 = vpop.permute.xlu0 %576
    %v579 = vadd.f32 %v569, %v577
    %v580 = vtanh.pop %v579
    %582 = vrot.lane.b32.xlu0 %v580, 32
    %v583 = vpop.permute.xlu0 %582
    %v585 = vmul.f32 %v567, %v583
    %587 = vrot.lane.b32.xlu0 %v585, 64
    %v588 = vpop.permute.xlu0 %587
    %v589 = vsel %vm187, %v588, 0
    %591 = vmatprep.subr.mxu0 0.0
    %592 = vmatpush1.msra.mxu0 0.0
    %593 = vmatprep.subr.mxu0 0.0
    %594 = vmatpush1.msra.mxu0 0.0
    %595 = vmatprep.subr.mxu0 0.0
    %596 = vmatpush1.msra.mxu0 0.0
    %597 = vmatprep.subr.mxu0 0.0
    %598 = vmatpush1.msra.mxu0 0.0
    %599 = vmatprep.subr.mxu0 0.0
    %600 = vmatpush1.msra.mxu0 0.0
    %601 = vmatprep.subr.mxu0 0.0
    %602 = vmatpush1.msra.mxu0 0.0
    %603 = vmatprep.subr.mxu0 0.0
    %604 = vmatpush1.msra.mxu0 0.0
    %605 = vmatprep.subr.mxu0 0.0
    %606 = vmatpush1.msra.mxu0 0.0
    %607 = vmatprep.subr.mxu0 0.0
    %608 = vmatpush1.msra.mxu0 0.0
    %609 = vmatprep.subr.mxu0 0.0
    %610 = vmatpush1.msra.mxu0 0.0
    %611 = vmatprep.subr.mxu0 0.0
    %612 = vmatpush1.msra.mxu0 0.0
    %613 = vmatprep.subr.mxu0 0.0
    %614 = vmatpush1.msra.mxu0 0.0
    %615 = vmatprep.subr.mxu0 0.0
    %616 = vmatpush1.msra.mxu0 %v45
    %617 = vmatprep.subr.mxu0 0.0
    %618 = vmatpush1.msra.mxu0 %v44
    %619 = vmatprep.subr.mxu0 0.0
    %620 = vmatpush1.msra.mxu0 %v43
    %621 = vmatprep.subr.mxu0 0.0
    %622 = vmatpush1.msra.mxu0 %v42
    %623 = vmatprep.subr.mxu0 0.0
    %624 = vmatpush2.msra.mxu0 0.0
    %625 = vmatprep.subr.mxu0 0.0
    %626 = vmatpush2.msra.mxu0 0.0
    %627 = vmatprep.subr.mxu0 0.0
    %628 = vmatpush2.msra.mxu0 0.0
    %629 = vmatprep.subr.mxu0 0.0
    %630 = vmatpush2.msra.mxu0 0.0
    %631 = vmatprep.subr.mxu0 0.0
    %632 = vmatpush2.msra.mxu0 0.0
    %633 = vmatprep.subr.mxu0 0.0
    %634 = vmatpush2.msra.mxu0 0.0
    %635 = vmatprep.subr.mxu0 0.0
    %636 = vmatpush2.msra.mxu0 0.0
    %637 = vmatprep.subr.mxu0 0.0
    %638 = vmatpush2.msra.mxu0 0.0
    %639 = vmatprep.subr.mxu0 0.0
    %640 = vmatpush2.msra.mxu0 0.0
    %641 = vmatprep.subr.mxu0 0.0
    %642 = vmatpush2.msra.mxu0 0.0
    %643 = vmatprep.subr.mxu0 0.0
    %644 = vmatpush2.msra.mxu0 0.0
    %645 = vmatprep.subr.mxu0 0.0
    %646 = vmatpush2.msra.mxu0 0.0
    %647 = vmatprep.subr.mxu0 0.0
    %648 = vmatpush2.msra.mxu0 0.0
    %649 = vmatprep.subr.mxu0 0.0
    %650 = vmatpush2.msra.mxu0 0.0
    %651 = vmatprep.subr.mxu0 0.0
    %652 = vmatpush2.msra.mxu0 0.0
    %653 = vmatprep.subr.mxu0 0.0
    %654 = vmatpush2.msra.mxu0 0.0
    %655 = vmatprep.mubr.f32.mxu0 0.0
    %656 = vmatmul.mubr.f32.gmra.mxu0 %v589
    %v657 = vpop.f32.mrf.mxu0
    %v658 = vadd.f32 0.0, %v657
    %v659 = vpop.f32.mrf.mxu0
    %660 = vdwg.mxu0
    %v661 = vadd.f32 %v169, %v658
    %v662 = vxor.u32 %v661, 2147483648
    %v663 = vmul.f32 %v662, 1.442695
    %v664 = vpow.pop %v663
    %v665 = vadd.f32 %v664, 1.0
    %v666 = vrcp.pop %v665
    %v667 = vmul.f32 1.0, %v666
    %v668 = vtanh.pop %v661
    %v669 = vmul.f32 %v667, %v579
    %671 = vrot.lane.b32.xlu0 %v668, 32
    %v672 = vpop.permute.xlu0 %671
    %v674 = vmul.f32 %v667, %v672
    %676 = vrot.lane.b32.xlu0 %v674, 32
    %v677 = vpop.permute.xlu0 %676
    %v679 = vadd.f32 %v669, %v677
    %v680 = vtanh.pop %v679
    %682 = vrot.lane.b32.xlu0 %v680, 32
    %v683 = vpop.permute.xlu0 %682
    %v685 = vmul.f32 %v667, %v683
    %687 = vrot.lane.b32.xlu0 %v685, 64
    %v688 = vpop.permute.xlu0 %687
    %v689 = vsel %vm187, %v688, 0
    %691 = vmatprep.subr.mxu0 0.0
    %692 = vmatpush1.msra.mxu0 0.0
    %693 = vmatprep.subr.mxu0 0.0
    %694 = vmatpush1.msra.mxu0 0.0
    %695 = vmatprep.subr.mxu0 0.0
    %696 = vmatpush1.msra.mxu0 0.0
    %697 = vmatprep.subr.mxu0 0.0
    %698 = vmatpush1.msra.mxu0 0.0
    %699 = vmatprep.subr.mxu0 0.0
    %700 = vmatpush1.msra.mxu0 0.0
    %701 = vmatprep.subr.mxu0 0.0
    %702 = vmatpush1.msra.mxu0 0.0
    %703 = vmatprep.subr.mxu0 0.0
    %704 = vmatpush1.msra.mxu0 0.0
    %705 = vmatprep.subr.mxu0 0.0
    %706 = vmatpush1.msra.mxu0 0.0
    %707 = vmatprep.subr.mxu0 0.0
    %708 = vmatpush1.msra.mxu0 0.0
    %709 = vmatprep.subr.mxu0 0.0
    %710 = vmatpush1.msra.mxu0 0.0
    %711 = vmatprep.subr.mxu0 0.0
    %712 = vmatpush1.msra.mxu0 0.0
    %713 = vmatprep.subr.mxu0 0.0
    %714 = vmatpush1.msra.mxu0 0.0
    %715 = vmatprep.subr.mxu0 0.0
    %716 = vmatpush1.msra.mxu0 %v45
    %717 = vmatprep.subr.mxu0 0.0
    %718 = vmatpush1.msra.mxu0 %v44
    %719 = vmatprep.subr.mxu0 0.0
    %720 = vmatpush1.msra.mxu0 %v43
    %721 = vmatprep.subr.mxu0 0.0
    %722 = vmatpush1.msra.mxu0 %v42
    %723 = vmatprep.subr.mxu0 0.0
    %724 = vmatpush2.msra.mxu0 0.0
    %725 = vmatprep.subr.mxu0 0.0
    %726 = vmatpush2.msra.mxu0 0.0
    %727 = vmatprep.subr.mxu0 0.0
    %728 = vmatpush2.msra.mxu0 0.0
    %729 = vmatprep.subr.mxu0 0.0
    %730 = vmatpush2.msra.mxu0 0.0
    %731 = vmatprep.subr.mxu0 0.0
    %732 = vmatpush2.msra.mxu0 0.0
    %733 = vmatprep.subr.mxu0 0.0
    %734 = vmatpush2.msra.mxu0 0.0
    %735 = vmatprep.subr.mxu0 0.0
    %736 = vmatpush2.msra.mxu0 0.0
    %737 = vmatprep.subr.mxu0 0.0
    %738 = vmatpush2.msra.mxu0 0.0
    %739 = vmatprep.subr.mxu0 0.0
    %740 = vmatpush2.msra.mxu0 0.0
    %741 = vmatprep.subr.mxu0 0.0
    %742 = vmatpush2.msra.mxu0 0.0
    %743 = vmatprep.subr.mxu0 0.0
    %744 = vmatpush2.msra.mxu0 0.0
    %745 = vmatprep.subr.mxu0 0.0
    %746 = vmatpush2.msra.mxu0 0.0
    %747 = vmatprep.subr.mxu0 0.0
    %748 = vmatpush2.msra.mxu0 0.0
    %749 = vmatprep.subr.mxu0 0.0
    %750 = vmatpush2.msra.mxu0 0.0
    %751 = vmatprep.subr.mxu0 0.0
    %752 = vmatpush2.msra.mxu0 0.0
    %753 = vmatprep.subr.mxu0 0.0
    %754 = vmatpush2.msra.mxu0 0.0
    %755 = vmatprep.mubr.f32.mxu0 0.0
    %756 = vmatmul.mubr.f32.gmra.mxu0 %v689
    %v757 = vpop.f32.mrf.mxu0
    %v758 = vadd.f32 0.0, %v757
    %v759 = vpop.f32.mrf.mxu0
    %760 = vdwg.mxu0
    %v761 = vadd.f32 %v174, %v758
    %v762 = vxor.u32 %v761, 2147483648
    %v763 = vmul.f32 %v762, 1.442695
    %v764 = vpow.pop %v763
    %v765 = vadd.f32 %v764, 1.0
    %v766 = vrcp.pop %v765
    %v767 = vmul.f32 1.0, %v766
    %v768 = vtanh.pop %v761
    %v769 = vmul.f32 %v767, %v679
    %771 = vrot.lane.b32.xlu0 %v768, 32
    %v772 = vpop.permute.xlu0 %771
    %v774 = vmul.f32 %v767, %v772
    %776 = vrot.lane.b32.xlu0 %v774, 32
    %v777 = vpop.permute.xlu0 %776
    %v779 = vadd.f32 %v769, %v777
    %v780 = vtanh.pop %v779
    %782 = vrot.lane.b32.xlu0 %v780, 32
    %v783 = vpop.permute.xlu0 %782
    %v785 = vmul.f32 %v767, %v783
    %787 = vrot.lane.b32.xlu0 %v785, 64
    %v788 = vpop.permute.xlu0 %787
    %v789 = vsel %vm187, %v788, 0
    %791 = vmatprep.subr.mxu0 0.0
    %792 = vmatpush1.msra.mxu0 0.0
    %793 = vmatprep.subr.mxu0 0.0
    %794 = vmatpush1.msra.mxu0 0.0
    %795 = vmatprep.subr.mxu0 0.0
    %796 = vmatpush1.msra.mxu0 0.0
    %797 = vmatprep.subr.mxu0 0.0
    %798 = vmatpush1.msra.mxu0 0.0
    %799 = vmatprep.subr.mxu0 0.0
    %800 = vmatpush1.msra.mxu0 0.0
    %801 = vmatprep.subr.mxu0 0.0
    %802 = vmatpush1.msra.mxu0 0.0
    %803 = vmatprep.subr.mxu0 0.0
    %804 = vmatpush1.msra.mxu0 0.0
    %805 = vmatprep.subr.mxu0 0.0
    %806 = vmatpush1.msra.mxu0 0.0
    %807 = vmatprep.subr.mxu0 0.0
    %808 = vmatpush1.msra.mxu0 0.0
    %809 = vmatprep.subr.mxu0 0.0
    %810 = vmatpush1.msra.mxu0 0.0
    %811 = vmatprep.subr.mxu0 0.0
    %812 = vmatpush1.msra.mxu0 0.0
    %813 = vmatprep.subr.mxu0 0.0
    %814 = vmatpush1.msra.mxu0 0.0
    %815 = vmatprep.subr.mxu0 0.0
    %816 = vmatpush1.msra.mxu0 %v45
    %817 = vmatprep.subr.mxu0 0.0
    %818 = vmatpush1.msra.mxu0 %v44
    %819 = vmatprep.subr.mxu0 0.0
    %820 = vmatpush1.msra.mxu0 %v43
    %821 = vmatprep.subr.mxu0 0.0
    %822 = vmatpush1.msra.mxu0 %v42
    %823 = vmatprep.subr.mxu0 0.0
    %824 = vmatpush2.msra.mxu0 0.0
    %825 = vmatprep.subr.mxu0 0.0
    %826 = vmatpush2.msra.mxu0 0.0
    %827 = vmatprep.subr.mxu0 0.0
    %828 = vmatpush2.msra.mxu0 0.0
    %829 = vmatprep.subr.mxu0 0.0
    %830 = vmatpush2.msra.mxu0 0.0
    %831 = vmatprep.subr.mxu0 0.0
    %832 = vmatpush2.msra.mxu0 0.0
    %833 = vmatprep.subr.mxu0 0.0
    %834 = vmatpush2.msra.mxu0 0.0
    %835 = vmatprep.subr.mxu0 0.0
    %836 = vmatpush2.msra.mxu0 0.0
    %837 = vmatprep.subr.mxu0 0.0
    %838 = vmatpush2.msra.mxu0 0.0
    %839 = vmatprep.subr.mxu0 0.0
    %840 = vmatpush2.msra.mxu0 0.0
    %841 = vmatprep.subr.mxu0 0.0
    %842 = vmatpush2.msra.mxu0 0.0
    %843 = vmatprep.subr.mxu0 0.0
    %844 = vmatpush2.msra.mxu0 0.0
    %845 = vmatprep.subr.mxu0 0.0
    %846 = vmatpush2.msra.mxu0 0.0
    %847 = vmatprep.subr.mxu0 0.0
    %848 = vmatpush2.msra.mxu0 0.0
    %849 = vmatprep.subr.mxu0 0.0
    %850 = vmatpush2.msra.mxu0 0.0
    %851 = vmatprep.subr.mxu0 0.0
    %852 = vmatpush2.msra.mxu0 0.0
    %853 = vmatprep.subr.mxu0 0.0
    %854 = vmatpush2.msra.mxu0 0.0
    %855 = vmatprep.mubr.f32.mxu0 0.0
    %856 = vmatmul.mubr.f32.gmra.mxu0 %v789
    %v857 = vpop.f32.mrf.mxu0
    %v858 = vadd.f32 0.0, %v857
    %v859 = vpop.f32.mrf.mxu0
    %860 = vdwg.mxu0
    %v861 = vadd.f32 %v179, %v858
    %v862 = vxor.u32 %v861, 2147483648
    %v863 = vmul.f32 %v862, 1.442695
    %v864 = vpow.pop %v863
    %v865 = vadd.f32 %v864, 1.0
    %v866 = vrcp.pop %v865
    %v867 = vmul.f32 1.0, %v866
    %v868 = vtanh.pop %v861
    %v869 = vmul.f32 %v867, %v779
    %871 = vrot.lane.b32.xlu0 %v868, 32
    %v872 = vpop.permute.xlu0 %871
    %v874 = vmul.f32 %v867, %v872
    %876 = vrot.lane.b32.xlu0 %v874, 32
    %v877 = vpop.permute.xlu0 %876
    %v879 = vadd.f32 %v869, %v877
    %v880 = vtanh.pop %v879
    %882 = vrot.lane.b32.xlu0 %v880, 32
    %v883 = vpop.permute.xlu0 %882
    %v885 = vmul.f32 %v867, %v883
    %887 = vrot.lane.b32.xlu0 %v885, 64
    %v888 = vpop.permute.xlu0 %887
    %v889 = vsel %vm187, %v888, 0
    %891 = vmatprep.subr.mxu0 0.0
    %892 = vmatpush1.msra.mxu0 0.0
    %893 = vmatprep.subr.mxu0 0.0
    %894 = vmatpush1.msra.mxu0 0.0
    %895 = vmatprep.subr.mxu0 0.0
    %896 = vmatpush1.msra.mxu0 0.0
    %897 = vmatprep.subr.mxu0 0.0
    %898 = vmatpush1.msra.mxu0 0.0
    %899 = vmatprep.subr.mxu0 0.0
    %900 = vmatpush1.msra.mxu0 0.0
    %901 = vmatprep.subr.mxu0 0.0
    %902 = vmatpush1.msra.mxu0 0.0
    %903 = vmatprep.subr.mxu0 0.0
    %904 = vmatpush1.msra.mxu0 0.0
    %905 = vmatprep.subr.mxu0 0.0
    %906 = vmatpush1.msra.mxu0 0.0
    %907 = vmatprep.subr.mxu0 0.0
    %908 = vmatpush1.msra.mxu0 0.0
    %909 = vmatprep.subr.mxu0 0.0
    %910 = vmatpush1.msra.mxu0 0.0
    %911 = vmatprep.subr.mxu0 0.0
    %912 = vmatpush1.msra.mxu0 0.0
    %913 = vmatprep.subr.mxu0 0.0
    %914 = vmatpush1.msra.mxu0 0.0
    %915 = vmatprep.subr.mxu0 0.0
    %916 = vmatpush1.msra.mxu0 %v45
    %917 = vmatprep.subr.mxu0 0.0
    %918 = vmatpush1.msra.mxu0 %v44
    %919 = vmatprep.subr.mxu0 0.0
    %920 = vmatpush1.msra.mxu0 %v43
    %921 = vmatprep.subr.mxu0 0.0
    %922 = vmatpush1.msra.mxu0 %v42
    %923 = vmatprep.subr.mxu0 0.0
    %924 = vmatpush2.msra.mxu0 0.0
    %925 = vmatprep.subr.mxu0 0.0
    %926 = vmatpush2.msra.mxu0 0.0
    %927 = vmatprep.subr.mxu0 0.0
    %928 = vmatpush2.msra.mxu0 0.0
    %929 = vmatprep.subr.mxu0 0.0
    %930 = vmatpush2.msra.mxu0 0.0
    %931 = vmatprep.subr.mxu0 0.0
    %932 = vmatpush2.msra.mxu0 0.0
    %933 = vmatprep.subr.mxu0 0.0
    %934 = vmatpush2.msra.mxu0 0.0
    %935 = vmatprep.subr.mxu0 0.0
    %936 = vmatpush2.msra.mxu0 0.0
    %937 = vmatprep.subr.mxu0 0.0
    %938 = vmatpush2.msra.mxu0 0.0
    %939 = vmatprep.subr.mxu0 0.0
    %940 = vmatpush2.msra.mxu0 0.0
    %941 = vmatprep.subr.mxu0 0.0
    %942 = vmatpush2.msra.mxu0 0.0
    %943 = vmatprep.subr.mxu0 0.0
    %944 = vmatpush2.msra.mxu0 0.0
    %945 = vmatprep.subr.mxu0 0.0
    %946 = vmatpush2.msra.mxu0 0.0
    %947 = vmatprep.subr.mxu0 0.0
    %948 = vmatpush2.msra.mxu0 0.0
    %949 = vmatprep.subr.mxu0 0.0
    %950 = vmatpush2.msra.mxu0 0.0
    %951 = vmatprep.subr.mxu0 0.0
    %952 = vmatpush2.msra.mxu0 0.0
    %953 = vmatprep.subr.mxu0 0.0
    %954 = vmatpush2.msra.mxu0 0.0
    %955 = vmatprep.mubr.f32.mxu0 0.0
    %956 = vmatmul.mubr.f32.gmra.mxu0 %v889
    %v957 = vpop.f32.mrf.mxu0
    %v958 = vadd.f32 0.0, %v957
    %v959 = vpop.f32.mrf.mxu0
    %960 = vdwg.mxu0
    %v961 = vadd.f32 %v184, %v958
    %v962 = vxor.u32 %v961, 2147483648
    %v963 = vmul.f32 %v962, 1.442695
    %v964 = vpow.pop %v963
    %v965 = vadd.f32 %v964, 1.0
    %v966 = vrcp.pop %v965
    %v967 = vmul.f32 1.0, %v966
    %v968 = vtanh.pop %v961
    %v969 = vmul.f32 %v967, %v879
    %971 = vrot.lane.b32.xlu0 %v968, 32
    %v972 = vpop.permute.xlu0 %971
    %v974 = vmul.f32 %v967, %v972
    %976 = vrot.lane.b32.xlu0 %v974, 32
    %v977 = vpop.permute.xlu0 %976
    %v979 = vadd.f32 %v969, %v977
    %v980 = vtanh.pop %v979
    %982 = vrot.lane.b32.xlu0 %v980, 32
    %v983 = vpop.permute.xlu0 %982
    %v985 = vmul.f32 %v967, %v983
    %v986 = vld [vmem:[%s4] sm:$0xff]
    %v987 = vld [vmem:[%s4 + $0x8] sm:$0xff]
    %v988 = vld [vmem:[%s4 + $0x10] sm:$0xff]
    %v989 = vld [vmem:[%s4 + $0x18] sm:$0xff]
    %v990 = vld [vmem:[%s5] sm:$0xff]
    %v991 = vld [vmem:[%s5 + $0x8] sm:$0xff]
    %v992 = vld [vmem:[%s5 + $0x10] sm:$0xff]
    %v993 = vld [vmem:[%s5 + $0x18] sm:$0xff]
    %v994 = vld [vmem:[%s6] sm:$0x1]
    %v996 = vlaneseq
    %v997 = vshrl.u32 %v996, 7
    %v998 = vsub.s32 0, %v997
    %v999 = vrot.slane %v994, %v998
    %1002 = vrot.lane.b32.xlu0 %v985, 64
    %v1003 = vpop.permute.xlu0 %1002
    %v1004 = vsel %vm187, %v1003, 0
    %1006 = vmatprep.subr.mxu0 0.0
    %1007 = vmatpush1.msra.mxu0 0.0
    %1008 = vmatprep.subr.mxu0 0.0
    %1009 = vmatpush1.msra.mxu0 0.0
    %1010 = vmatprep.subr.mxu0 0.0
    %1011 = vmatpush1.msra.mxu0 0.0
    %1012 = vmatprep.subr.mxu0 0.0
    %1013 = vmatpush1.msra.mxu0 0.0
    %1014 = vmatprep.subr.mxu0 0.0
    %1015 = vmatpush1.msra.mxu0 0.0
    %1016 = vmatprep.subr.mxu0 0.0
    %1017 = vmatpush1.msra.mxu0 0.0
    %1018 = vmatprep.subr.mxu0 0.0
    %1019 = vmatpush1.msra.mxu0 0.0
    %1020 = vmatprep.subr.mxu0 0.0
    %1021 = vmatpush1.msra.mxu0 0.0
    %1022 = vmatprep.subr.mxu0 0.0
    %1023 = vmatpush1.msra.mxu0 0.0
    %1024 = vmatprep.subr.mxu0 0.0
    %1025 = vmatpush1.msra.mxu0 0.0
    %1026 = vmatprep.subr.mxu0 0.0
    %1027 = vmatpush1.msra.mxu0 0.0
    %1028 = vmatprep.subr.mxu0 0.0
    %1029 = vmatpush1.msra.mxu0 0.0
    %1030 = vmatprep.subr.mxu0 0.0
    %1031 = vmatpush1.msra.mxu0 %v989
    %1032 = vmatprep.subr.mxu0 0.0
    %1033 = vmatpush1.msra.mxu0 %v988
    %1034 = vmatprep.subr.mxu0 0.0
    %1035 = vmatpush1.msra.mxu0 %v987
    %1036 = vmatprep.subr.mxu0 0.0
    %1037 = vmatpush1.msra.mxu0 %v986
    %1038 = vmatprep.subr.mxu0 0.0
    %1039 = vmatpush2.msra.mxu0 0.0
    %1040 = vmatprep.subr.mxu0 0.0
    %1041 = vmatpush2.msra.mxu0 0.0
    %1042 = vmatprep.subr.mxu0 0.0
    %1043 = vmatpush2.msra.mxu0 0.0
    %1044 = vmatprep.subr.mxu0 0.0
    %1045 = vmatpush2.msra.mxu0 0.0
    %1046 = vmatprep.subr.mxu0 0.0
    %1047 = vmatpush2.msra.mxu0 0.0
    %1048 = vmatprep.subr.mxu0 0.0
    %1049 = vmatpush2.msra.mxu0 0.0
    %1050 = vmatprep.subr.mxu0 0.0
    %1051 = vmatpush2.msra.mxu0 0.0
    %1052 = vmatprep.subr.mxu0 0.0
    %1053 = vmatpush2.msra.mxu0 0.0
    %1054 = vmatprep.subr.mxu0 0.0
    %1055 = vmatpush2.msra.mxu0 0.0
    %1056 = vmatprep.subr.mxu0 0.0
    %1057 = vmatpush2.msra.mxu0 0.0
    %1058 = vmatprep.subr.mxu0 0.0
    %1059 = vmatpush2.msra.mxu0 0.0
    %1060 = vmatprep.subr.mxu0 0.0
    %1061 = vmatpush2.msra.mxu0 0.0
    %1062 = vmatprep.subr.mxu0 0.0
    %1063 = vmatpush2.msra.mxu0 0.0
    %1064 = vmatprep.subr.mxu0 0.0
    %1065 = vmatpush2.msra.mxu0 0.0
    %1066 = vmatprep.subr.mxu0 0.0
    %1067 = vmatpush2.msra.mxu0 0.0
    %1068 = vmatprep.subr.mxu0 0.0
    %1069 = vmatpush2.msra.mxu0 0.0
    %1070 = vmatprep.mubr.f32.mxu0 0.0
    %1071 = vmatmul.mubr.f32.gmra.mxu0 %v289
    %v1072 = vpop.f32.mrf.mxu0
    %v1073 = vadd.f32 %v999, %v1072
    %v1074 = vpop.f32.mrf.mxu0
    %1075 = vmatprep.mubr.f32.mxu0 0.0
    %1076 = vmatmul.mubr.f32.gmra.mxu0 %v389
    %v1077 = vpop.f32.mrf.mxu0
    %v1078 = vadd.f32 %v999, %v1077
    %v1079 = vpop.f32.mrf.mxu0
    %1080 = vmatprep.mubr.f32.mxu0 0.0
    %1081 = vmatmul.mubr.f32.gmra.mxu0 %v489
    %v1082 = vpop.f32.mrf.mxu0
    %v1083 = vadd.f32 %v999, %v1082
    %v1084 = vpop.f32.mrf.mxu0
    %1085 = vmatprep.mubr.f32.mxu0 0.0
    %1086 = vmatmul.mubr.f32.gmra.mxu0 %v589
    %v1087 = vpop.f32.mrf.mxu0
    %v1088 = vadd.f32 %v999, %v1087
    %v1089 = vpop.f32.mrf.mxu0
    %1090 = vmatprep.mubr.f32.mxu0 0.0
    %1091 = vmatmul.mubr.f32.gmra.mxu0 %v689
    %v1092 = vpop.f32.mrf.mxu0
    %v1093 = vadd.f32 %v999, %v1092
    %v1094 = vpop.f32.mrf.mxu0
    %1095 = vmatprep.mubr.f32.mxu0 0.0
    %1096 = vmatmul.mubr.f32.gmra.mxu0 %v789
    %v1097 = vpop.f32.mrf.mxu0
    %v1098 = vadd.f32 %v999, %v1097
    %v1099 = vpop.f32.mrf.mxu0
    %1100 = vmatprep.mubr.f32.mxu0 0.0
    %1101 = vmatmul.mubr.f32.gmra.mxu0 %v889
    %v1102 = vpop.f32.mrf.mxu0
    %v1103 = vadd.f32 %v999, %v1102
    %v1104 = vpop.f32.mrf.mxu0
    %1105 = vmatprep.mubr.f32.mxu0 0.0
    %1106 = vmatmul.mubr.f32.gmra.mxu0 %v1004
    %v1107 = vpop.f32.mrf.mxu0
    %v1108 = vadd.f32 %v999, %v1107
    %v1109 = vpop.f32.mrf.mxu0
    %1110 = vdwg.mxu0
    %1111 = vmatprep.subr.mxu0 0.0
    %1112 = vmatpush1.msra.mxu0 0.0
    %1113 = vmatprep.subr.mxu0 0.0
    %1114 = vmatpush1.msra.mxu0 0.0
    %1115 = vmatprep.subr.mxu0 0.0
    %1116 = vmatpush1.msra.mxu0 0.0
    %1117 = vmatprep.subr.mxu0 0.0
    %1118 = vmatpush1.msra.mxu0 0.0
    %1119 = vmatprep.subr.mxu0 0.0
    %1120 = vmatpush1.msra.mxu0 0.0
    %1121 = vmatprep.subr.mxu0 0.0
    %1122 = vmatpush1.msra.mxu0 0.0
    %1123 = vmatprep.subr.mxu0 0.0
    %1124 = vmatpush1.msra.mxu0 0.0
    %1125 = vmatprep.subr.mxu0 0.0
    %1126 = vmatpush1.msra.mxu0 0.0
    %1127 = vmatprep.subr.mxu0 0.0
    %1128 = vmatpush1.msra.mxu0 0.0
    %1129 = vmatprep.subr.mxu0 0.0
    %1130 = vmatpush1.msra.mxu0 0.0
    %1131 = vmatprep.subr.mxu0 0.0
    %1132 = vmatpush1.msra.mxu0 0.0
    %1133 = vmatprep.subr.mxu0 0.0
    %1134 = vmatpush1.msra.mxu0 0.0
    %1135 = vmatprep.subr.mxu0 0.0
    %1136 = vmatpush1.msra.mxu0 %v993
    %1137 = vmatprep.subr.mxu0 0.0
    %1138 = vmatpush1.msra.mxu0 %v992
    %1139 = vmatprep.subr.mxu0 0.0
    %1140 = vmatpush1.msra.mxu0 %v991
    %1141 = vmatprep.subr.mxu0 0.0
    %1142 = vmatpush1.msra.mxu0 %v990
    %1143 = vmatprep.subr.mxu0 0.0
    %1144 = vmatpush2.msra.mxu0 0.0
    %1145 = vmatprep.subr.mxu0 0.0
    %1146 = vmatpush2.msra.mxu0 0.0
    %1147 = vmatprep.subr.mxu0 0.0
    %1148 = vmatpush2.msra.mxu0 0.0
    %1149 = vmatprep.subr.mxu0 0.0
    %1150 = vmatpush2.msra.mxu0 0.0
    %1151 = vmatprep.subr.mxu0 0.0
    %1152 = vmatpush2.msra.mxu0 0.0
    %1153 = vmatprep.subr.mxu0 0.0
    %1154 = vmatpush2.msra.mxu0 0.0
    %1155 = vmatprep.subr.mxu0 0.0
    %1156 = vmatpush2.msra.mxu0 0.0
    %1157 = vmatprep.subr.mxu0 0.0
    %1158 = vmatpush2.msra.mxu0 0.0
    %1159 = vmatprep.subr.mxu0 0.0
    %1160 = vmatpush2.msra.mxu0 0.0
    %1161 = vmatprep.subr.mxu0 0.0
    %1162 = vmatpush2.msra.mxu0 0.0
    %1163 = vmatprep.subr.mxu0 0.0
    %1164 = vmatpush2.msra.mxu0 0.0
    %1165 = vmatprep.subr.mxu0 0.0
    %1166 = vmatpush2.msra.mxu0 0.0
    %1167 = vmatprep.subr.mxu0 0.0
    %1168 = vmatpush2.msra.mxu0 0.0
    %1169 = vmatprep.subr.mxu0 0.0
    %1170 = vmatpush2.msra.mxu0 0.0
    %1171 = vmatprep.subr.mxu0 0.0
    %1172 = vmatpush2.msra.mxu0 0.0
    %1173 = vmatprep.subr.mxu0 0.0
    %1174 = vmatpush2.msra.mxu0 0.0
    %1175 = vmatprep.mubr.f32.mxu0 0.0
    %1176 = vmatmul.mubr.f32.gmra.mxu0 %v189
    %v1177 = vpop.f32.mrf.mxu0
    %v1178 = vadd.f32 0.0, %v1177
    %v1179 = vpop.f32.mrf.mxu0
    %1180 = vdwg.mxu0
    %v1181 = vadd.f32 %v1073, %v1178
    %v1182 = vxor.u32 %v1181, 2147483648
    %v1183 = vmul.f32 %v1182, 1.442695
    %v1184 = vpow.pop %v1183
    %v1185 = vadd.f32 %v1184, 1.0
    %v1186 = vrcp.pop %v1185
    %v1187 = vmul.f32 1.0, %v1186
    %v1188 = vtanh.pop %v1181
    %v1189 = vmul.f32 %v1187, 0.0
    %1191 = vrot.lane.b32.xlu0 %v1188, 32
    %v1192 = vpop.permute.xlu0 %1191
    %v1194 = vmul.f32 %v1187, %v1192
    %1196 = vrot.lane.b32.xlu0 %v1194, 32
    %v1197 = vpop.permute.xlu0 %1196
    %v1199 = vadd.f32 %v1189, %v1197
    %v1200 = vtanh.pop %v1199
    %1202 = vrot.lane.b32.xlu0 %v1200, 32
    %v1203 = vpop.permute.xlu0 %1202
    %v1205 = vmul.f32 %v1187, %v1203
    %1207 = vrot.lane.b32.xlu0 %v1205, 64
    %v1208 = vpop.permute.xlu0 %1207
    %v1209 = vsel %vm187, %v1208, 0
    %1211 = vmatprep.subr.mxu0 0.0
    %1212 = vmatpush1.msra.mxu0 0.0
    %1213 = vmatprep.subr.mxu0 0.0
    %1214 = vmatpush1.msra.mxu0 0.0
    %1215 = vmatprep.subr.mxu0 0.0
    %1216 = vmatpush1.msra.mxu0 0.0
    %1217 = vmatprep.subr.mxu0 0.0
    %1218 = vmatpush1.msra.mxu0 0.0
    %1219 = vmatprep.subr.mxu0 0.0
    %1220 = vmatpush1.msra.mxu0 0.0
    %1221 = vmatprep.subr.mxu0 0.0
    %1222 = vmatpush1.msra.mxu0 0.0
    %1223 = vmatprep.subr.mxu0 0.0
    %1224 = vmatpush1.msra.mxu0 0.0
    %1225 = vmatprep.subr.mxu0 0.0
    %1226 = vmatpush1.msra.mxu0 0.0
    %1227 = vmatprep.subr.mxu0 0.0
    %1228 = vmatpush1.msra.mxu0 0.0
    %1229 = vmatprep.subr.mxu0 0.0
    %1230 = vmatpush1.msra.mxu0 0.0
    %1231 = vmatprep.subr.mxu0 0.0
    %1232 = vmatpush1.msra.mxu0 0.0
    %1233 = vmatprep.subr.mxu0 0.0
    %1234 = vmatpush1.msra.mxu0 0.0
    %1235 = vmatprep.subr.mxu0 0.0
    %1236 = vmatpush1.msra.mxu0 %v993
    %1237 = vmatprep.subr.mxu0 0.0
    %1238 = vmatpush1.msra.mxu0 %v992
    %1239 = vmatprep.subr.mxu0 0.0
    %1240 = vmatpush1.msra.mxu0 %v991
    %1241 = vmatprep.subr.mxu0 0.0
    %1242 = vmatpush1.msra.mxu0 %v990
    %1243 = vmatprep.subr.mxu0 0.0
    %1244 = vmatpush2.msra.mxu0 0.0
    %1245 = vmatprep.subr.mxu0 0.0
    %1246 = vmatpush2.msra.mxu0 0.0
    %1247 = vmatprep.subr.mxu0 0.0
    %1248 = vmatpush2.msra.mxu0 0.0
    %1249 = vmatprep.subr.mxu0 0.0
    %1250 = vmatpush2.msra.mxu0 0.0
    %1251 = vmatprep.subr.mxu0 0.0
    %1252 = vmatpush2.msra.mxu0 0.0
    %1253 = vmatprep.subr.mxu0 0.0
    %1254 = vmatpush2.msra.mxu0 0.0
    %1255 = vmatprep.subr.mxu0 0.0
    %1256 = vmatpush2.msra.mxu0 0.0
    %1257 = vmatprep.subr.mxu0 0.0
    %1258 = vmatpush2.msra.mxu0 0.0
    %1259 = vmatprep.subr.mxu0 0.0
    %1260 = vmatpush2.msra.mxu0 0.0
    %1261 = vmatprep.subr.mxu0 0.0
    %1262 = vmatpush2.msra.mxu0 0.0
    %1263 = vmatprep.subr.mxu0 0.0
    %1264 = vmatpush2.msra.mxu0 0.0
    %1265 = vmatprep.subr.mxu0 0.0
    %1266 = vmatpush2.msra.mxu0 0.0
    %1267 = vmatprep.subr.mxu0 0.0
    %1268 = vmatpush2.msra.mxu0 0.0
    %1269 = vmatprep.subr.mxu0 0.0
    %1270 = vmatpush2.msra.mxu0 0.0
    %1271 = vmatprep.subr.mxu0 0.0
    %1272 = vmatpush2.msra.mxu0 0.0
    %1273 = vmatprep.subr.mxu0 0.0
    %1274 = vmatpush2.msra.mxu0 0.0
    %1275 = vmatprep.mubr.f32.mxu0 0.0
    %1276 = vmatmul.mubr.f32.gmra.mxu0 %v1209
    %v1277 = vpop.f32.mrf.mxu0
    %v1278 = vadd.f32 0.0, %v1277
    %v1279 = vpop.f32.mrf.mxu0
    %1280 = vdwg.mxu0
    %v1281 = vadd.f32 %v1078, %v1278
    %v1282 = vxor.u32 %v1281, 2147483648
    %v1283 = vmul.f32 %v1282, 1.442695
    %v1284 = vpow.pop %v1283
    %v1285 = vadd.f32 %v1284, 1.0
    %v1286 = vrcp.pop %v1285
    %v1287 = vmul.f32 1.0, %v1286
    %v1288 = vtanh.pop %v1281
    %v1289 = vmul.f32 %v1287, %v1199
    %1291 = vrot.lane.b32.xlu0 %v1288, 32
    %v1292 = vpop.permute.xlu0 %1291
    %v1294 = vmul.f32 %v1287, %v1292
    %1296 = vrot.lane.b32.xlu0 %v1294, 32
    %v1297 = vpop.permute.xlu0 %1296
    %v1299 = vadd.f32 %v1289, %v1297
    %v1300 = vtanh.pop %v1299
    %1302 = vrot.lane.b32.xlu0 %v1300, 32
    %v1303 = vpop.permute.xlu0 %1302
    %v1305 = vmul.f32 %v1287, %v1303
    %1307 = vrot.lane.b32.xlu0 %v1305, 64
    %v1308 = vpop.permute.xlu0 %1307
    %v1309 = vsel %vm187, %v1308, 0
    %1311 = vmatprep.subr.mxu0 0.0
    %1312 = vmatpush1.msra.mxu0 0.0
    %1313 = vmatprep.subr.mxu0 0.0
    %1314 = vmatpush1.msra.mxu0 0.0
    %1315 = vmatprep.subr.mxu0 0.0
    %1316 = vmatpush1.msra.mxu0 0.0
    %1317 = vmatprep.subr.mxu0 0.0
    %1318 = vmatpush1.msra.mxu0 0.0
    %1319 = vmatprep.subr.mxu0 0.0
    %1320 = vmatpush1.msra.mxu0 0.0
    %1321 = vmatprep.subr.mxu0 0.0
    %1322 = vmatpush1.msra.mxu0 0.0
    %1323 = vmatprep.subr.mxu0 0.0
    %1324 = vmatpush1.msra.mxu0 0.0
    %1325 = vmatprep.subr.mxu0 0.0
    %1326 = vmatpush1.msra.mxu0 0.0
    %1327 = vmatprep.subr.mxu0 0.0
    %1328 = vmatpush1.msra.mxu0 0.0
    %1329 = vmatprep.subr.mxu0 0.0
    %1330 = vmatpush1.msra.mxu0 0.0
    %1331 = vmatprep.subr.mxu0 0.0
    %1332 = vmatpush1.msra.mxu0 0.0
    %1333 = vmatprep.subr.mxu0 0.0
    %1334 = vmatpush1.msra.mxu0 0.0
    %1335 = vmatprep.subr.mxu0 0.0
    %1336 = vmatpush1.msra.mxu0 %v993
    %1337 = vmatprep.subr.mxu0 0.0
    %1338 = vmatpush1.msra.mxu0 %v992
    %1339 = vmatprep.subr.mxu0 0.0
    %1340 = vmatpush1.msra.mxu0 %v991
    %1341 = vmatprep.subr.mxu0 0.0
    %1342 = vmatpush1.msra.mxu0 %v990
    %1343 = vmatprep.subr.mxu0 0.0
    %1344 = vmatpush2.msra.mxu0 0.0
    %1345 = vmatprep.subr.mxu0 0.0
    %1346 = vmatpush2.msra.mxu0 0.0
    %1347 = vmatprep.subr.mxu0 0.0
    %1348 = vmatpush2.msra.mxu0 0.0
    %1349 = vmatprep.subr.mxu0 0.0
    %1350 = vmatpush2.msra.mxu0 0.0
    %1351 = vmatprep.subr.mxu0 0.0
    %1352 = vmatpush2.msra.mxu0 0.0
    %1353 = vmatprep.subr.mxu0 0.0
    %1354 = vmatpush2.msra.mxu0 0.0
    %1355 = vmatprep.subr.mxu0 0.0
    %1356 = vmatpush2.msra.mxu0 0.0
    %1357 = vmatprep.subr.mxu0 0.0
    %1358 = vmatpush2.msra.mxu0 0.0
    %1359 = vmatprep.subr.mxu0 0.0
    %1360 = vmatpush2.msra.mxu0 0.0
    %1361 = vmatprep.subr.mxu0 0.0
    %1362 = vmatpush2.msra.mxu0 0.0
    %1363 = vmatprep.subr.mxu0 0.0
    %1364 = vmatpush2.msra.mxu0 0.0
    %1365 = vmatprep.subr.mxu0 0.0
    %1366 = vmatpush2.msra.mxu0 0.0
    %1367 = vmatprep.subr.mxu0 0.0
    %1368 = vmatpush2.msra.mxu0 0.0
    %1369 = vmatprep.subr.mxu0 0.0
    %1370 = vmatpush2.msra.mxu0 0.0
    %1371 = vmatprep.subr.mxu0 0.0
    %1372 = vmatpush2.msra.mxu0 0.0
    %1373 = vmatprep.subr.mxu0 0.0
    %1374 = vmatpush2.msra.mxu0 0.0
    %1375 = vmatprep.mubr.f32.mxu0 0.0
    %1376 = vmatmul.mubr.f32.gmra.mxu0 %v1309
    %v1377 = vpop.f32.mrf.mxu0
    %v1378 = vadd.f32 0.0, %v1377
    %v1379 = vpop.f32.mrf.mxu0
    %1380 = vdwg.mxu0
    %v1381 = vadd.f32 %v1083, %v1378
    %v1382 = vxor.u32 %v1381, 2147483648
    %v1383 = vmul.f32 %v1382, 1.442695
    %v1384 = vpow.pop %v1383
    %v1385 = vadd.f32 %v1384, 1.0
    %v1386 = vrcp.pop %v1385
    %v1387 = vmul.f32 1.0, %v1386
    %v1388 = vtanh.pop %v1381
    %v1389 = vmul.f32 %v1387, %v1299
    %1391 = vrot.lane.b32.xlu0 %v1388, 32
    %v1392 = vpop.permute.xlu0 %1391
    %v1394 = vmul.f32 %v1387, %v1392
    %1396 = vrot.lane.b32.xlu0 %v1394, 32
    %v1397 = vpop.permute.xlu0 %1396
    %v1399 = vadd.f32 %v1389, %v1397
    %v1400 = vtanh.pop %v1399
    %1402 = vrot.lane.b32.xlu0 %v1400, 32
    %v1403 = vpop.permute.xlu0 %1402
    %v1405 = vmul.f32 %v1387, %v1403
    %1407 = vrot.lane.b32.xlu0 %v1405, 64
    %v1408 = vpop.permute.xlu0 %1407
    %v1409 = vsel %vm187, %v1408, 0
    %1411 = vmatprep.subr.mxu0 0.0
    %1412 = vmatpush1.msra.mxu0 0.0
    %1413 = vmatprep.subr.mxu0 0.0
    %1414 = vmatpush1.msra.mxu0 0.0
    %1415 = vmatprep.subr.mxu0 0.0
    %1416 = vmatpush1.msra.mxu0 0.0
    %1417 = vmatprep.subr.mxu0 0.0
    %1418 = vmatpush1.msra.mxu0 0.0
    %1419 = vmatprep.subr.mxu0 0.0
    %1420 = vmatpush1.msra.mxu0 0.0
    %1421 = vmatprep.subr.mxu0 0.0
    %1422 = vmatpush1.msra.mxu0 0.0
    %1423 = vmatprep.subr.mxu0 0.0
    %1424 = vmatpush1.msra.mxu0 0.0
    %1425 = vmatprep.subr.mxu0 0.0
    %1426 = vmatpush1.msra.mxu0 0.0
    %1427 = vmatprep.subr.mxu0 0.0
    %1428 = vmatpush1.msra.mxu0 0.0
    %1429 = vmatprep.subr.mxu0 0.0
    %1430 = vmatpush1.msra.mxu0 0.0
    %1431 = vmatprep.subr.mxu0 0.0
    %1432 = vmatpush1.msra.mxu0 0.0
    %1433 = vmatprep.subr.mxu0 0.0
    %1434 = vmatpush1.msra.mxu0 0.0
    %1435 = vmatprep.subr.mxu0 0.0
    %1436 = vmatpush1.msra.mxu0 %v993
    %1437 = vmatprep.subr.mxu0 0.0
    %1438 = vmatpush1.msra.mxu0 %v992
    %1439 = vmatprep.subr.mxu0 0.0
    %1440 = vmatpush1.msra.mxu0 %v991
    %1441 = vmatprep.subr.mxu0 0.0
    %1442 = vmatpush1.msra.mxu0 %v990
    %1443 = vmatprep.subr.mxu0 0.0
    %1444 = vmatpush2.msra.mxu0 0.0
    %1445 = vmatprep.subr.mxu0 0.0
    %1446 = vmatpush2.msra.mxu0 0.0
    %1447 = vmatprep.subr.mxu0 0.0
    %1448 = vmatpush2.msra.mxu0 0.0
    %1449 = vmatprep.subr.mxu0 0.0
    %1450 = vmatpush2.msra.mxu0 0.0
    %1451 = vmatprep.subr.mxu0 0.0
    %1452 = vmatpush2.msra.mxu0 0.0
    %1453 = vmatprep.subr.mxu0 0.0
    %1454 = vmatpush2.msra.mxu0 0.0
    %1455 = vmatprep.subr.mxu0 0.0
    %1456 = vmatpush2.msra.mxu0 0.0
    %1457 = vmatprep.subr.mxu0 0.0
    %1458 = vmatpush2.msra.mxu0 0.0
    %1459 = vmatprep.subr.mxu0 0.0
    %1460 = vmatpush2.msra.mxu0 0.0
    %1461 = vmatprep.subr.mxu0 0.0
    %1462 = vmatpush2.msra.mxu0 0.0
    %1463 = vmatprep.subr.mxu0 0.0
    %1464 = vmatpush2.msra.mxu0 0.0
    %1465 = vmatprep.subr.mxu0 0.0
    %1466 = vmatpush2.msra.mxu0 0.0
    %1467 = vmatprep.subr.mxu0 0.0
    %1468 = vmatpush2.msra.mxu0 0.0
    %1469 = vmatprep.subr.mxu0 0.0
    %1470 = vmatpush2.msra.mxu0 0.0
    %1471 = vmatprep.subr.mxu0 0.0
    %1472 = vmatpush2.msra.mxu0 0.0
    %1473 = vmatprep.subr.mxu0 0.0
    %1474 = vmatpush2.msra.mxu0 0.0
    %1475 = vmatprep.mubr.f32.mxu0 0.0
    %1476 = vmatmul.mubr.f32.gmra.mxu0 %v1409
    %v1477 = vpop.f32.mrf.mxu0
    %v1478 = vadd.f32 0.0, %v1477
    %v1479 = vpop.f32.mrf.mxu0
    %1480 = vdwg.mxu0
    %v1481 = vadd.f32 %v1088, %v1478
    %v1482 = vxor.u32 %v1481, 2147483648
    %v1483 = vmul.f32 %v1482, 1.442695
    %v1484 = vpow.pop %v1483
    %v1485 = vadd.f32 %v1484, 1.0
    %v1486 = vrcp.pop %v1485
    %v1487 = vmul.f32 1.0, %v1486
    %v1488 = vtanh.pop %v1481
    %v1489 = vmul.f32 %v1487, %v1399
    %1491 = vrot.lane.b32.xlu0 %v1488, 32
    %v1492 = vpop.permute.xlu0 %1491
    %v1494 = vmul.f32 %v1487, %v1492
    %1496 = vrot.lane.b32.xlu0 %v1494, 32
    %v1497 = vpop.permute.xlu0 %1496
    %v1499 = vadd.f32 %v1489, %v1497
    %v1500 = vtanh.pop %v1499
    %1502 = vrot.lane.b32.xlu0 %v1500, 32
    %v1503 = vpop.permute.xlu0 %1502
    %v1505 = vmul.f32 %v1487, %v1503
    %1507 = vrot.lane.b32.xlu0 %v1505, 64
    %v1508 = vpop.permute.xlu0 %1507
    %v1509 = vsel %vm187, %v1508, 0
    %1511 = vmatprep.subr.mxu0 0.0
    %1512 = vmatpush1.msra.mxu0 0.0
    %1513 = vmatprep.subr.mxu0 0.0
    %1514 = vmatpush1.msra.mxu0 0.0
    %1515 = vmatprep.subr.mxu0 0.0
    %1516 = vmatpush1.msra.mxu0 0.0
    %1517 = vmatprep.subr.mxu0 0.0
    %1518 = vmatpush1.msra.mxu0 0.0
    %1519 = vmatprep.subr.mxu0 0.0
    %1520 = vmatpush1.msra.mxu0 0.0
    %1521 = vmatprep.subr.mxu0 0.0
    %1522 = vmatpush1.msra.mxu0 0.0
    %1523 = vmatprep.subr.mxu0 0.0
    %1524 = vmatpush1.msra.mxu0 0.0
    %1525 = vmatprep.subr.mxu0 0.0
    %1526 = vmatpush1.msra.mxu0 0.0
    %1527 = vmatprep.subr.mxu0 0.0
    %1528 = vmatpush1.msra.mxu0 0.0
    %1529 = vmatprep.subr.mxu0 0.0
    %1530 = vmatpush1.msra.mxu0 0.0
    %1531 = vmatprep.subr.mxu0 0.0
    %1532 = vmatpush1.msra.mxu0 0.0
    %1533 = vmatprep.subr.mxu0 0.0
    %1534 = vmatpush1.msra.mxu0 0.0
    %1535 = vmatprep.subr.mxu0 0.0
    %1536 = vmatpush1.msra.mxu0 %v993
    %1537 = vmatprep.subr.mxu0 0.0
    %1538 = vmatpush1.msra.mxu0 %v992
    %1539 = vmatprep.subr.mxu0 0.0
    %1540 = vmatpush1.msra.mxu0 %v991
    %1541 = vmatprep.subr.mxu0 0.0
    %1542 = vmatpush1.msra.mxu0 %v990
    %1543 = vmatprep.subr.mxu0 0.0
    %1544 = vmatpush2.msra.mxu0 0.0
    %1545 = vmatprep.subr.mxu0 0.0
    %1546 = vmatpush2.msra.mxu0 0.0
    %1547 = vmatprep.subr.mxu0 0.0
    %1548 = vmatpush2.msra.mxu0 0.0
    %1549 = vmatprep.subr.mxu0 0.0
    %1550 = vmatpush2.msra.mxu0 0.0
    %1551 = vmatprep.subr.mxu0 0.0
    %1552 = vmatpush2.msra.mxu0 0.0
    %1553 = vmatprep.subr.mxu0 0.0
    %1554 = vmatpush2.msra.mxu0 0.0
    %1555 = vmatprep.subr.mxu0 0.0
    %1556 = vmatpush2.msra.mxu0 0.0
    %1557 = vmatprep.subr.mxu0 0.0
    %1558 = vmatpush2.msra.mxu0 0.0
    %1559 = vmatprep.subr.mxu0 0.0
    %1560 = vmatpush2.msra.mxu0 0.0
    %1561 = vmatprep.subr.mxu0 0.0
    %1562 = vmatpush2.msra.mxu0 0.0
    %1563 = vmatprep.subr.mxu0 0.0
    %1564 = vmatpush2.msra.mxu0 0.0
    %1565 = vmatprep.subr.mxu0 0.0
    %1566 = vmatpush2.msra.mxu0 0.0
    %1567 = vmatprep.subr.mxu0 0.0
    %1568 = vmatpush2.msra.mxu0 0.0
    %1569 = vmatprep.subr.mxu0 0.0
    %1570 = vmatpush2.msra.mxu0 0.0
    %1571 = vmatprep.subr.mxu0 0.0
    %1572 = vmatpush2.msra.mxu0 0.0
    %1573 = vmatprep.subr.mxu0 0.0
    %1574 = vmatpush2.msra.mxu0 0.0
    %1575 = vmatprep.mubr.f32.mxu0 0.0
    %1576 = vmatmul.mubr.f32.gmra.mxu0 %v1509
    %v1577 = vpop.f32.mrf.mxu0
    %v1578 = vadd.f32 0.0, %v1577
    %v1579 = vpop.f32.mrf.mxu0
    %1580 = vdwg.mxu0
    %v1581 = vadd.f32 %v1093, %v1578
    %v1582 = vxor.u32 %v1581, 2147483648
    %v1583 = vmul.f32 %v1582, 1.442695
    %v1584 = vpow.pop %v1583
    %v1585 = vadd.f32 %v1584, 1.0
    %v1586 = vrcp.pop %v1585
    %v1587 = vmul.f32 1.0, %v1586
    %v1588 = vtanh.pop %v1581
    %v1589 = vmul.f32 %v1587, %v1499
    %1591 = vrot.lane.b32.xlu0 %v1588, 32
    %v1592 = vpop.permute.xlu0 %1591
    %v1594 = vmul.f32 %v1587, %v1592
    %1596 = vrot.lane.b32.xlu0 %v1594, 32
    %v1597 = vpop.permute.xlu0 %1596
    %v1599 = vadd.f32 %v1589, %v1597
    %v1600 = vtanh.pop %v1599
    %1602 = vrot.lane.b32.xlu0 %v1600, 32
    %v1603 = vpop.permute.xlu0 %1602
    %v1605 = vmul.f32 %v1587, %v1603
    %1607 = vrot.lane.b32.xlu0 %v1605, 64
    %v1608 = vpop.permute.xlu0 %1607
    %v1609 = vsel %vm187, %v1608, 0
    %1611 = vmatprep.subr.mxu0 0.0
    %1612 = vmatpush1.msra.mxu0 0.0
    %1613 = vmatprep.subr.mxu0 0.0
    %1614 = vmatpush1.msra.mxu0 0.0
    %1615 = vmatprep.subr.mxu0 0.0
    %1616 = vmatpush1.msra.mxu0 0.0
    %1617 = vmatprep.subr.mxu0 0.0
    %1618 = vmatpush1.msra.mxu0 0.0
    %1619 = vmatprep.subr.mxu0 0.0
    %1620 = vmatpush1.msra.mxu0 0.0
    %1621 = vmatprep.subr.mxu0 0.0
    %1622 = vmatpush1.msra.mxu0 0.0
    %1623 = vmatprep.subr.mxu0 0.0
    %1624 = vmatpush1.msra.mxu0 0.0
    %1625 = vmatprep.subr.mxu0 0.0
    %1626 = vmatpush1.msra.mxu0 0.0
    %1627 = vmatprep.subr.mxu0 0.0
    %1628 = vmatpush1.msra.mxu0 0.0
    %1629 = vmatprep.subr.mxu0 0.0
    %1630 = vmatpush1.msra.mxu0 0.0
    %1631 = vmatprep.subr.mxu0 0.0
    %1632 = vmatpush1.msra.mxu0 0.0
    %1633 = vmatprep.subr.mxu0 0.0
    %1634 = vmatpush1.msra.mxu0 0.0
    %1635 = vmatprep.subr.mxu0 0.0
    %1636 = vmatpush1.msra.mxu0 %v993
    %1637 = vmatprep.subr.mxu0 0.0
    %1638 = vmatpush1.msra.mxu0 %v992
    %1639 = vmatprep.subr.mxu0 0.0
    %1640 = vmatpush1.msra.mxu0 %v991
    %1641 = vmatprep.subr.mxu0 0.0
    %1642 = vmatpush1.msra.mxu0 %v990
    %1643 = vmatprep.subr.mxu0 0.0
    %1644 = vmatpush2.msra.mxu0 0.0
    %1645 = vmatprep.subr.mxu0 0.0
    %1646 = vmatpush2.msra.mxu0 0.0
    %1647 = vmatprep.subr.mxu0 0.0
    %1648 = vmatpush2.msra.mxu0 0.0
    %1649 = vmatprep.subr.mxu0 0.0
    %1650 = vmatpush2.msra.mxu0 0.0
    %1651 = vmatprep.subr.mxu0 0.0
    %1652 = vmatpush2.msra.mxu0 0.0
    %1653 = vmatprep.subr.mxu0 0.0
    %1654 = vmatpush2.msra.mxu0 0.0
    %1655 = vmatprep.subr.mxu0 0.0
    %1656 = vmatpush2.msra.mxu0 0.0
    %1657 = vmatprep.subr.mxu0 0.0
    %1658 = vmatpush2.msra.mxu0 0.0
    %1659 = vmatprep.subr.mxu0 0.0
    %1660 = vmatpush2.msra.mxu0 0.0
    %1661 = vmatprep.subr.mxu0 0.0
    %1662 = vmatpush2.msra.mxu0 0.0
    %1663 = vmatprep.subr.mxu0 0.0
    %1664 = vmatpush2.msra.mxu0 0.0
    %1665 = vmatprep.subr.mxu0 0.0
    %1666 = vmatpush2.msra.mxu0 0.0
    %1667 = vmatprep.subr.mxu0 0.0
    %1668 = vmatpush2.msra.mxu0 0.0
    %1669 = vmatprep.subr.mxu0 0.0
    %1670 = vmatpush2.msra.mxu0 0.0
    %1671 = vmatprep.subr.mxu0 0.0
    %1672 = vmatpush2.msra.mxu0 0.0
    %1673 = vmatprep.subr.mxu0 0.0
    %1674 = vmatpush2.msra.mxu0 0.0
    %1675 = vmatprep.mubr.f32.mxu0 0.0
    %1676 = vmatmul.mubr.f32.gmra.mxu0 %v1609
    %v1677 = vpop.f32.mrf.mxu0
    %v1678 = vadd.f32 0.0, %v1677
    %v1679 = vpop.f32.mrf.mxu0
    %1680 = vdwg.mxu0
    %v1681 = vadd.f32 %v1098, %v1678
    %v1682 = vxor.u32 %v1681, 2147483648
    %v1683 = vmul.f32 %v1682, 1.442695
    %v1684 = vpow.pop %v1683
    %v1685 = vadd.f32 %v1684, 1.0
    %v1686 = vrcp.pop %v1685
    %v1687 = vmul.f32 1.0, %v1686
    %v1688 = vtanh.pop %v1681
    %v1689 = vmul.f32 %v1687, %v1599
    %1691 = vrot.lane.b32.xlu0 %v1688, 32
    %v1692 = vpop.permute.xlu0 %1691
    %v1694 = vmul.f32 %v1687, %v1692
    %1696 = vrot.lane.b32.xlu0 %v1694, 32
    %v1697 = vpop.permute.xlu0 %1696
    %v1699 = vadd.f32 %v1689, %v1697
    %v1700 = vtanh.pop %v1699
    %1702 = vrot.lane.b32.xlu0 %v1700, 32
    %v1703 = vpop.permute.xlu0 %1702
    %v1705 = vmul.f32 %v1687, %v1703
    %1707 = vrot.lane.b32.xlu0 %v1705, 64
    %v1708 = vpop.permute.xlu0 %1707
    %v1709 = vsel %vm187, %v1708, 0
    %1711 = vmatprep.subr.mxu0 0.0
    %1712 = vmatpush1.msra.mxu0 0.0
    %1713 = vmatprep.subr.mxu0 0.0
    %1714 = vmatpush1.msra.mxu0 0.0
    %1715 = vmatprep.subr.mxu0 0.0
    %1716 = vmatpush1.msra.mxu0 0.0
    %1717 = vmatprep.subr.mxu0 0.0
    %1718 = vmatpush1.msra.mxu0 0.0
    %1719 = vmatprep.subr.mxu0 0.0
    %1720 = vmatpush1.msra.mxu0 0.0
    %1721 = vmatprep.subr.mxu0 0.0
    %1722 = vmatpush1.msra.mxu0 0.0
    %1723 = vmatprep.subr.mxu0 0.0
    %1724 = vmatpush1.msra.mxu0 0.0
    %1725 = vmatprep.subr.mxu0 0.0
    %1726 = vmatpush1.msra.mxu0 0.0
    %1727 = vmatprep.subr.mxu0 0.0
    %1728 = vmatpush1.msra.mxu0 0.0
    %1729 = vmatprep.subr.mxu0 0.0
    %1730 = vmatpush1.msra.mxu0 0.0
    %1731 = vmatprep.subr.mxu0 0.0
    %1732 = vmatpush1.msra.mxu0 0.0
    %1733 = vmatprep.subr.mxu0 0.0
    %1734 = vmatpush1.msra.mxu0 0.0
    %1735 = vmatprep.subr.mxu0 0.0
    %1736 = vmatpush1.msra.mxu0 %v993
    %1737 = vmatprep.subr.mxu0 0.0
    %1738 = vmatpush1.msra.mxu0 %v992
    %1739 = vmatprep.subr.mxu0 0.0
    %1740 = vmatpush1.msra.mxu0 %v991
    %1741 = vmatprep.subr.mxu0 0.0
    %1742 = vmatpush1.msra.mxu0 %v990
    %1743 = vmatprep.subr.mxu0 0.0
    %1744 = vmatpush2.msra.mxu0 0.0
    %1745 = vmatprep.subr.mxu0 0.0
    %1746 = vmatpush2.msra.mxu0 0.0
    %1747 = vmatprep.subr.mxu0 0.0
    %1748 = vmatpush2.msra.mxu0 0.0
    %1749 = vmatprep.subr.mxu0 0.0
    %1750 = vmatpush2.msra.mxu0 0.0
    %1751 = vmatprep.subr.mxu0 0.0
    %1752 = vmatpush2.msra.mxu0 0.0
    %1753 = vmatprep.subr.mxu0 0.0
    %1754 = vmatpush2.msra.mxu0 0.0
    %1755 = vmatprep.subr.mxu0 0.0
    %1756 = vmatpush2.msra.mxu0 0.0
    %1757 = vmatprep.subr.mxu0 0.0
    %1758 = vmatpush2.msra.mxu0 0.0
    %1759 = vmatprep.subr.mxu0 0.0
    %1760 = vmatpush2.msra.mxu0 0.0
    %1761 = vmatprep.subr.mxu0 0.0
    %1762 = vmatpush2.msra.mxu0 0.0
    %1763 = vmatprep.subr.mxu0 0.0
    %1764 = vmatpush2.msra.mxu0 0.0
    %1765 = vmatprep.subr.mxu0 0.0
    %1766 = vmatpush2.msra.mxu0 0.0
    %1767 = vmatprep.subr.mxu0 0.0
    %1768 = vmatpush2.msra.mxu0 0.0
    %1769 = vmatprep.subr.mxu0 0.0
    %1770 = vmatpush2.msra.mxu0 0.0
    %1771 = vmatprep.subr.mxu0 0.0
    %1772 = vmatpush2.msra.mxu0 0.0
    %1773 = vmatprep.subr.mxu0 0.0
    %1774 = vmatpush2.msra.mxu0 0.0
    %1775 = vmatprep.mubr.f32.mxu0 0.0
    %1776 = vmatmul.mubr.f32.gmra.mxu0 %v1709
    %v1777 = vpop.f32.mrf.mxu0
    %v1778 = vadd.f32 0.0, %v1777
    %v1779 = vpop.f32.mrf.mxu0
    %1780 = vdwg.mxu0
    %v1781 = vadd.f32 %v1103, %v1778
    %v1782 = vxor.u32 %v1781, 2147483648
    %v1783 = vmul.f32 %v1782, 1.442695
    %v1784 = vpow.pop %v1783
    %v1785 = vadd.f32 %v1784, 1.0
    %v1786 = vrcp.pop %v1785
    %v1787 = vmul.f32 1.0, %v1786
    %v1788 = vtanh.pop %v1781
    %v1789 = vmul.f32 %v1787, %v1699
    %1791 = vrot.lane.b32.xlu0 %v1788, 32
    %v1792 = vpop.permute.xlu0 %1791
    %v1794 = vmul.f32 %v1787, %v1792
    %1796 = vrot.lane.b32.xlu0 %v1794, 32
    %v1797 = vpop.permute.xlu0 %1796
    %v1799 = vadd.f32 %v1789, %v1797
    %v1800 = vtanh.pop %v1799
    %1802 = vrot.lane.b32.xlu0 %v1800, 32
    %v1803 = vpop.permute.xlu0 %1802
    %v1805 = vmul.f32 %v1787, %v1803
    %1807 = vrot.lane.b32.xlu0 %v1805, 64
    %v1808 = vpop.permute.xlu0 %1807
    %v1809 = vsel %vm187, %v1808, 0
    %1811 = vmatprep.subr.mxu0 0.0
    %1812 = vmatpush1.msra.mxu0 0.0
    %1813 = vmatprep.subr.mxu0 0.0
    %1814 = vmatpush1.msra.mxu0 0.0
    %1815 = vmatprep.subr.mxu0 0.0
    %1816 = vmatpush1.msra.mxu0 0.0
    %1817 = vmatprep.subr.mxu0 0.0
    %1818 = vmatpush1.msra.mxu0 0.0
    %1819 = vmatprep.subr.mxu0 0.0
    %1820 = vmatpush1.msra.mxu0 0.0
    %1821 = vmatprep.subr.mxu0 0.0
    %1822 = vmatpush1.msra.mxu0 0.0
    %1823 = vmatprep.subr.mxu0 0.0
    %1824 = vmatpush1.msra.mxu0 0.0
    %1825 = vmatprep.subr.mxu0 0.0
    %1826 = vmatpush1.msra.mxu0 0.0
    %1827 = vmatprep.subr.mxu0 0.0
    %1828 = vmatpush1.msra.mxu0 0.0
    %1829 = vmatprep.subr.mxu0 0.0
    %1830 = vmatpush1.msra.mxu0 0.0
    %1831 = vmatprep.subr.mxu0 0.0
    %1832 = vmatpush1.msra.mxu0 0.0
    %1833 = vmatprep.subr.mxu0 0.0
    %1834 = vmatpush1.msra.mxu0 0.0
    %1835 = vmatprep.subr.mxu0 0.0
    %1836 = vmatpush1.msra.mxu0 %v993
    %1837 = vmatprep.subr.mxu0 0.0
    %1838 = vmatpush1.msra.mxu0 %v992
    %1839 = vmatprep.subr.mxu0 0.0
    %1840 = vmatpush1.msra.mxu0 %v991
    %1841 = vmatprep.subr.mxu0 0.0
    %1842 = vmatpush1.msra.mxu0 %v990
    %1843 = vmatprep.subr.mxu0 0.0
    %1844 = vmatpush2.msra.mxu0 0.0
    %1845 = vmatprep.subr.mxu0 0.0
    %1846 = vmatpush2.msra.mxu0 0.0
    %1847 = vmatprep.subr.mxu0 0.0
    %1848 = vmatpush2.msra.mxu0 0.0
    %1849 = vmatprep.subr.mxu0 0.0
    %1850 = vmatpush2.msra.mxu0 0.0
    %1851 = vmatprep.subr.mxu0 0.0
    %1852 = vmatpush2.msra.mxu0 0.0
    %1853 = vmatprep.subr.mxu0 0.0
    %1854 = vmatpush2.msra.mxu0 0.0
    %1855 = vmatprep.subr.mxu0 0.0
    %1856 = vmatpush2.msra.mxu0 0.0
    %1857 = vmatprep.subr.mxu0 0.0
    %1858 = vmatpush2.msra.mxu0 0.0
    %1859 = vmatprep.subr.mxu0 0.0
    %1860 = vmatpush2.msra.mxu0 0.0
    %1861 = vmatprep.subr.mxu0 0.0
    %1862 = vmatpush2.msra.mxu0 0.0
    %1863 = vmatprep.subr.mxu0 0.0
    %1864 = vmatpush2.msra.mxu0 0.0
    %1865 = vmatprep.subr.mxu0 0.0
    %1866 = vmatpush2.msra.mxu0 0.0
    %1867 = vmatprep.subr.mxu0 0.0
    %1868 = vmatpush2.msra.mxu0 0.0
    %1869 = vmatprep.subr.mxu0 0.0
    %1870 = vmatpush2.msra.mxu0 0.0
    %1871 = vmatprep.subr.mxu0 0.0
    %1872 = vmatpush2.msra.mxu0 0.0
    %1873 = vmatprep.subr.mxu0 0.0
    %1874 = vmatpush2.msra.mxu0 0.0
    %1875 = vmatprep.mubr.f32.mxu0 0.0
    %1876 = vmatmul.mubr.f32.gmra.mxu0 %v1809
    %v1877 = vpop.f32.mrf.mxu0
    %v1878 = vadd.f32 0.0, %v1877
    %v1879 = vpop.f32.mrf.mxu0
    %1880 = vdwg.mxu0
    %v1881 = vadd.f32 %v1108, %v1878
    %v1882 = vxor.u32 %v1881, 2147483648
    %v1883 = vmul.f32 %v1882, 1.442695
    %v1884 = vpow.pop %v1883
    %v1885 = vadd.f32 %v1884, 1.0
    %v1886 = vrcp.pop %v1885
    %v1887 = vmul.f32 1.0, %v1886
    %v1888 = vtanh.pop %v1881
    %v1889 = vmul.f32 %v1887, %v1799
    %1891 = vrot.lane.b32.xlu0 %v1888, 32
    %v1892 = vpop.permute.xlu0 %1891
    %v1894 = vmul.f32 %v1887, %v1892
    %1896 = vrot.lane.b32.xlu0 %v1894, 32
    %v1897 = vpop.permute.xlu0 %1896
    %v1899 = vadd.f32 %v1889, %v1897
    %v1900 = vtanh.pop %v1899
    %1902 = vrot.lane.b32.xlu0 %v1900, 32
    %v1903 = vpop.permute.xlu0 %1902
    %v1905 = vmul.f32 %v1887, %v1903
    %v1906 = vld [vmem:[%s7] sm:$0xff]
    %v1907 = vld [vmem:[%s7 + $0x8] sm:$0xff]
    %v1908 = vld [vmem:[%s7 + $0x10] sm:$0xff]
    %v1909 = vld [vmem:[%s7 + $0x18] sm:$0xff]
    %v1910 = vld [vmem:[%s8] sm:$0x1]
    %v1912 = vlaneseq
    %v1913 = vshrl.u32 %v1912, 7
    %v1914 = vsub.s32 0, %v1913
    %v1915 = vrot.slane %v1910, %v1914
    %1918 = vrot.lane.b32.xlu0 %v1905, 64
    %v1919 = vpop.permute.xlu0 %1918
    %v1920 = vsel %vm187, %v1919, 0
    %1922 = vmatprep.subr.mxu0 0.0
    %1923 = vmatpush1.msra.mxu0 0.0
    %1924 = vmatprep.subr.mxu0 0.0
    %1925 = vmatpush1.msra.mxu0 0.0
    %1926 = vmatprep.subr.mxu0 0.0
    %1927 = vmatpush1.msra.mxu0 0.0
    %1928 = vmatprep.subr.mxu0 0.0
    %1929 = vmatpush1.msra.mxu0 0.0
    %1930 = vmatprep.subr.mxu0 0.0
    %1931 = vmatpush1.msra.mxu0 0.0
    %1932 = vmatprep.subr.mxu0 0.0
    %1933 = vmatpush1.msra.mxu0 0.0
    %1934 = vmatprep.subr.mxu0 0.0
    %1935 = vmatpush1.msra.mxu0 0.0
    %1936 = vmatprep.subr.mxu0 0.0
    %1937 = vmatpush1.msra.mxu0 0.0
    %1938 = vmatprep.subr.mxu0 0.0
    %1939 = vmatpush1.msra.mxu0 0.0
    %1940 = vmatprep.subr.mxu0 0.0
    %1941 = vmatpush1.msra.mxu0 0.0
    %1942 = vmatprep.subr.mxu0 0.0
    %1943 = vmatpush1.msra.mxu0 0.0
    %1944 = vmatprep.subr.mxu0 0.0
    %1945 = vmatpush1.msra.mxu0 0.0
    %1946 = vmatprep.subr.mxu0 0.0
    %1947 = vmatpush1.msra.mxu0 %v1909
    %1948 = vmatprep.subr.mxu0 0.0
    %1949 = vmatpush1.msra.mxu0 %v1908
    %1950 = vmatprep.subr.mxu0 0.0
    %1951 = vmatpush1.msra.mxu0 %v1907
    %1952 = vmatprep.subr.mxu0 0.0
    %1953 = vmatpush1.msra.mxu0 %v1906
    %1954 = vmatprep.subr.mxu0 0.0
    %1955 = vmatpush2.msra.mxu0 0.0
    %1956 = vmatprep.subr.mxu0 0.0
    %1957 = vmatpush2.msra.mxu0 0.0
    %1958 = vmatprep.subr.mxu0 0.0
    %1959 = vmatpush2.msra.mxu0 0.0
    %1960 = vmatprep.subr.mxu0 0.0
    %1961 = vmatpush2.msra.mxu0 0.0
    %1962 = vmatprep.subr.mxu0 0.0
    %1963 = vmatpush2.msra.mxu0 0.0
    %1964 = vmatprep.subr.mxu0 0.0
    %1965 = vmatpush2.msra.mxu0 0.0
    %1966 = vmatprep.subr.mxu0 0.0
    %1967 = vmatpush2.msra.mxu0 0.0
    %1968 = vmatprep.subr.mxu0 0.0
    %1969 = vmatpush2.msra.mxu0 0.0
    %1970 = vmatprep.subr.mxu0 0.0
    %1971 = vmatpush2.msra.mxu0 0.0
    %1972 = vmatprep.subr.mxu0 0.0
    %1973 = vmatpush2.msra.mxu0 0.0
    %1974 = vmatprep.subr.mxu0 0.0
    %1975 = vmatpush2.msra.mxu0 0.0
    %1976 = vmatprep.subr.mxu0 0.0
    %1977 = vmatpush2.msra.mxu0 0.0
    %1978 = vmatprep.subr.mxu0 0.0
    %1979 = vmatpush2.msra.mxu0 0.0
    %1980 = vmatprep.subr.mxu0 0.0
    %1981 = vmatpush2.msra.mxu0 0.0
    %1982 = vmatprep.subr.mxu0 0.0
    %1983 = vmatpush2.msra.mxu0 0.0
    %1984 = vmatprep.subr.mxu0 0.0
    %1985 = vmatpush2.msra.mxu0 0.0
    %1986 = vmatprep.mubr.f32.mxu0 0.0
    %1987 = vmatmul.mubr.f32.gmra.mxu0 %v1920
    %v1988 = vpop.f32.mrf.mxu0
    %v1989 = vadd.f32 %v1915, %v1988
    %v1990 = vpop.f32.mrf.mxu0
    %1991 = vdwg.mxu0
    %vm1992 = vcmask 97280
    %1993 = vst.msk [vmem:[#allocation2] sm:$0xff] %vm1992, %v1989
    // Predicated region
    $region38: #{tpu_custom_call.1} parent=1 // pred_check
      _
    $region39: #{tpu_custom_call.1} parent=1 // pred_check_branch
      %1995 = sbr.rel (0) target = $region41
    $region40: #{tpu_custom_call.1} parent=1 // pred_region
      %s1997 = ssub.s32 128, 128
      %1998 = vsyncadd [#allocation3], %s1997
      %s2000 = sshll.u32 [#allocation2], 4
      %s2001 = int_to_ptr.vmem [resolvable:$true] %s2000
      %2003 = dma.vmem_to_hbm [thread:$0]  %s2001, 128, %s9, [#allocation3]
    $region41: #{tpu_custom_call.1} parent=1 // pred_fallthru
      _
    // Predicated region
    $region42: #{tpu_custom_call.1} parent=1 // pred_check
      _
    $region43: #{tpu_custom_call.1} parent=1 // pred_check_branch
      %2005 = sbr.rel (0) target = $region45
    $region44: #{tpu_custom_call.1} parent=1 // pred_region
      %2006 = dma.done [#allocation3], 128
    $region45: #{tpu_custom_call.1} parent=1 // pred_fallthru
      _
    %2007 = vsyncpa [#allocation3], 1

</llo_original>
